<compile_context>
chip_gen: v5e
topology: v5e:2x2
jax: 0.10.0
libtpu: 0.0.40
codegen_flags: <defaults>
</compile_context>

<pallas_src>
import math
import functools

import jax
import jax.numpy as jnp
from jax.experimental import pallas as pl
from jax.experimental.pallas import tpu as pltpu


def _round_up(x, m):
    return ((x + m - 1) // m) * m


def _choose_batch_tile(B, S, target_rows=128):
    """Largest divisor of B such that TB*S ~ target_rows while keeping at
    least two grid steps (so v7x's second TensorCore gets work)."""
    cap = max(1, target_rows // max(S, 1))
    if B >= 2:
        cap = min(cap, max(1, B // 2))
    tb = 1
    for d in range(1, min(cap, B) + 1):
        if B % d == 0:
            tb = d
    return tb


def _mha_classifier_kernel(nhead, head_dim,
                           x_ref,
                           w_in_ref, b_in_ref,
                           w_q_ref, b_q_ref,
                           w_k_ref, b_k_ref,
                           w_v_ref, b_v_ref,
                           w_o_ref, b_o_ref,
                           w_c_ref, b_c_ref,
                           out_ref):
    TB, S, F = x_ref.shape
    ninp = w_in_ref.shape[1]
    cdt = w_in_ref.dtype            # compute dtype for matmul operands

    # ---- input projection on the whole (TB*S, F) slab ----------------------
    x2 = x_ref[...].reshape(TB * S, F)
    h = jnp.dot(x2, w_in_ref[...],
                preferred_element_type=jnp.float32) + b_in_ref[...]   # f32
    h_c = h.astype(cdt)

    # ---- Q/K/V projections (weights pre-transposed, scale folded into Q) ---
    q = jnp.dot(h_c, w_q_ref[...], preferred_element_type=jnp.float32) + b_q_ref[...]
    k = jnp.dot(h_c, w_k_ref[...], preferred_element_type=jnp.float32) + b_k_ref[...]
    v = jnp.dot(h_c, w_v_ref[...], preferred_element_type=jnp.float32) + b_v_ref[...]

    q3 = q.reshape(TB, S, ninp).astype(cdt)
    k3 = k.reshape(TB, S, ninp).astype(cdt)
    v3 = v.reshape(TB, S, ninp).astype(cdt)

    # ---- per-head attention, pooled over S, folded into W_o ----------------
    # Static loop over heads (nhead is small); each head runs TB-batched
    # einsums.  A 4-D two-batch-dim einsum would need an in-kernel minor-dim
    # transpose, so the per-head loop is kept but without any concatenate.
    o_pooled = jnp.zeros((TB, ninp), jnp.float32)
    for hd in range(nhead):
        lo = hd * head_dim
        qh = q3[:, :, lo:lo + head_dim]                       # (TB, S, dh)
        kh = k3[:, :, lo:lo + head_dim]
        vh = v3[:, :, lo:lo + head_dim]
        s = jnp.einsum('bqd,bkd->bqk', qh, kh,
                       preferred_element_type=jnp.float32)    # (TB, S, S)
        m = jnp.max(s, axis=-1, keepdims=True)
        e = jnp.exp(s - m)
        denom = jnp.sum(e, axis=-1, keepdims=True)            # (TB, S, 1)
        av = jnp.einsum('bqk,bkd->bqd', e.astype(cdt), vh,
                        preferred_element_type=jnp.float32)   # (TB, S, dh)
        # deferred softmax normalization (divide on (TB,S,dh), not (TB,S,S))
        av = av * pl.reciprocal(denom, approx=False)
        # TODO(synk): attention_dropout is identity (inference mode).
        pooled_h = jnp.mean(av, axis=1)                       # (TB, dh)
        # mean commutes with the output projection: fold W_o slice in now.
        o_pooled = o_pooled + jnp.dot(
            pooled_h.astype(cdt), w_o_ref[lo:lo + head_dim, :],
            preferred_element_type=jnp.float32)
    o_pooled = o_pooled + b_o_ref[...]                        # (TB, ninp)
    # TODO(synk): self.dropout is identity (inference mode).

    # ---- classifier (output padded to 128 lanes -> unmasked store) ---------
    logits = jnp.dot(o_pooled.astype(cdt), w_c_ref[...],
                     preferred_element_type=jnp.float32) + b_c_ref[...]
    out_ref[...] = logits.reshape(TB, 1, logits.shape[-1])


def mha_classifier_forward(x, params, *, nhead, compute_dtype=jnp.float32):
    B, S, F = x.shape
    ninp = params["w_in"].shape[0]
    num_classes = params["w_c"].shape[0]
    head_dim = ninp // nhead
    ncp = _round_up(num_classes, 128)        # lane-dense output slab
    scale = 1.0 / math.sqrt(head_dim)

    # Host-side weight prep (one-time XLA ops, not per-grid-step work):
    #  - transpose every weight to (in, out) so the kernel never transposes,
    #  - fold the attention scale into the Q projection,
    #  - zero-pad the classifier to 128 output lanes.
    # Biases stay f32; matmul operands use compute_dtype (bf16 on v6e/v7x).
    w_in = params["w_in"].T.astype(compute_dtype)           # (F, ninp)
    w_q = (params["w_q"] * scale).T.astype(compute_dtype)   # (ninp, ninp)
    w_k = params["w_k"].T.astype(compute_dtype)
    w_v = params["w_v"].T.astype(compute_dtype)
    w_o = params["w_o"].T.astype(compute_dtype)
    w_c = jnp.zeros((ninp, ncp), jnp.float32).at[:, :num_classes].set(
        params["w_c"].T).astype(compute_dtype)
    b_in = params["b_in"].reshape(1, ninp).astype(jnp.float32)
    b_q = (params["b_q"] * scale).reshape(1, ninp).astype(jnp.float32)
    b_k = params["b_k"].reshape(1, ninp).astype(jnp.float32)
    b_v = params["b_v"].reshape(1, ninp).astype(jnp.float32)
    b_o = params["b_o"].reshape(1, ninp).astype(jnp.float32)
    b_c = jnp.zeros((1, ncp), jnp.float32).at[:, :num_classes].set(
        params["b_c"].reshape(1, num_classes))

    x_c = x.astype(compute_dtype)

    TB = _choose_batch_tile(B, S)
    grid = (B // TB,)

    weight_args = (w_in, b_in, w_q, b_q, w_k, b_k, w_v, b_v, w_o, b_o, w_c, b_c)

    def const_spec(arr):
        # Full-array resident block, constant index across the grid.
        # (At large ninp on v7x these could be single-buffered; at these
        #  sizes the default double-buffering is far below the VMEM limit.)
        return pl.BlockSpec(arr.shape, lambda b: (0, 0))

    kernel = functools.partial(_mha_classifier_kernel, nhead, head_dim)

    out = pl.pallas_call(
        kernel,
        out_shape=jax.ShapeDtypeStruct((B, 1, ncp), jnp.float32),
        grid_spec=pltpu.PrefetchScalarGridSpec(
            num_scalar_prefetch=0,
            grid=grid,
            in_specs=[pl.BlockSpec((TB, S, F), lambda b: (b, 0, 0))]
                     + [const_spec(w) for w in weight_args],
            out_specs=pl.BlockSpec((TB, 1, ncp), lambda b: (b, 0, 0)),
        ),
        compiler_params=pltpu.CompilerParams(
            dimension_semantics=("parallel",)),
    )(x_c, *weight_args)

    return out[:, 0, :num_classes]


def reference_forward(x, params, *, nhead):
    """Pure-JAX reference mirroring the PyTorch module (eval mode)."""
    ninp = params["w_in"].shape[0]
    head_dim = ninp // nhead
    h = jnp.einsum("bsf,nf->bsn", x, params["w_in"]) + params["b_in"]
    q = jnp.einsum("bsn,mn->bsm", h, params["w_q"]) + params["b_q"]
    k = jnp.einsum("bsn,mn->bsm", h, params["w_k"]) + params["b_k"]
    v = jnp.einsum("bsn,mn->bsm", h, params["w_v"]) + params["b_v"]
    B, S, _ = h.shape
    q = q.reshape(B, S, nhead, head_dim).transpose(0, 2, 1, 3) / math.sqrt(head_dim)
    k = k.reshape(B, S, nhead, head_dim).transpose(0, 2, 1, 3)
    v = v.reshape(B, S, nhead, head_dim).transpose(0, 2, 1, 3)
    s = jnp.einsum("bhqd,bhkd->bhqk", q, k)
    p = jax.nn.softmax(s, axis=-1)
    a = jnp.einsum("bhqk,bhkd->bhqd", p, v).transpose(0, 2, 1, 3).reshape(B, S, ninp)
    o = jnp.einsum("bsn,mn->bsm", a, params["w_o"]) + params["b_o"]
    pooled = jnp.mean(o, axis=1)
    return jnp.einsum("bn,cn->bc", pooled, params["w_c"]) + params["b_c"]


def init_params(key, out_features, ninp, num_classes):
    ks = jax.random.split(key, 12)
    scale = 0.1
    return {
        "w_in": scale * jax.random.normal(ks[0], (ninp, out_features), jnp.float32),
        "b_in": scale * jax.random.normal(ks[1], (1, ninp), jnp.float32),
        "w_q": scale * jax.random.normal(ks[2], (ninp, ninp), jnp.float32),
        "b_q": scale * jax.random.normal(ks[3], (1, ninp), jnp.float32),
        "w_k": scale * jax.random.normal(ks[4], (ninp, ninp), jnp.float32),
        "b_k": scale * jax.random.normal(ks[5], (1, ninp), jnp.float32),
        "w_v": scale * jax.random.normal(ks[6], (ninp, ninp), jnp.float32),
        "b_v": scale * jax.random.normal(ks[7], (1, ninp), jnp.float32),
        "w_o": scale * jax.random.normal(ks[8], (ninp, ninp), jnp.float32),
        "b_o": scale * jax.random.normal(ks[9], (1, ninp), jnp.float32),
        "w_c": scale * jax.random.normal(ks[10], (num_classes, ninp), jnp.float32),
        "b_c": scale * jax.random.normal(ks[11], (1, num_classes), jnp.float32),
    }


if __name__ == "__main__":
    # Small shapes consistent with the module's forward:
    # x: (batch=8, seq=8, out_features=32), ninp=32, nhead=4, num_classes=10.
    # B=8 -> batch tile TB=4, grid=(2,) (two parallel steps).
    B, S, F = 8, 8, 32
    ninp, nhead, num_classes = 32, 4, 10

    key = jax.random.PRNGKey(0)
    k_x, k_p = jax.random.split(key)
    x = jax.random.normal(k_x, (B, S, F), jnp.float32)
    params = init_params(k_p, F, ninp, num_classes)

    ref = reference_forward(x, params, nhead=nhead)

    # f32 path (exact-tolerance check)
    out = mha_classifier_forward(x, params, nhead=nhead)
    out = jax.block_until_ready(out)
    assert out.shape == (B, num_classes)
    assert jnp.allclose(out, ref, atol=1e-4, rtol=1e-4), (out, ref)

    # mixed-precision path (bf16 matmul operands, f32 accumulation) — the
    # recommended configuration on v6e / v7x.
    out_bf16 = mha_classifier_forward(x, params, nhead=nhead,
                                      compute_dtype=jnp.bfloat16)
    out_bf16 = jax.block_until_ready(out_bf16)
    assert out_bf16.shape == (B, num_classes)
    assert jnp.allclose(out_bf16, ref, atol=5e-2, rtol=5e-2), (out_bf16, ref)

    print("KERNEL_OK")
</pallas_src>

<mosaic_0001>
module attributes {stable_mosaic.version = 11 : i64} {
  func.func @_mha_classifier_kernel(%arg0: i32, %arg1: memref<4x8x32xf32, #tpu.memory_space<vmem>>, %arg2: memref<32x32xf32, #tpu.memory_space<vmem>>, %arg3: memref<1x32xf32, #tpu.memory_space<vmem>>, %arg4: memref<32x32xf32, #tpu.memory_space<vmem>>, %arg5: memref<1x32xf32, #tpu.memory_space<vmem>>, %arg6: memref<32x32xf32, #tpu.memory_space<vmem>>, %arg7: memref<1x32xf32, #tpu.memory_space<vmem>>, %arg8: memref<32x32xf32, #tpu.memory_space<vmem>>, %arg9: memref<1x32xf32, #tpu.memory_space<vmem>>, %arg10: memref<32x32xf32, #tpu.memory_space<vmem>>, %arg11: memref<1x32xf32, #tpu.memory_space<vmem>>, %arg12: memref<32x128xf32, #tpu.memory_space<vmem>>, %arg13: memref<1x128xf32, #tpu.memory_space<vmem>>, %arg14: memref<4x1x128xf32, #tpu.memory_space<vmem>>) attributes {dimension_semantics = [#tpu.dimension_semantics<parallel>], iteration_bounds = array<i64: 2>, scalar_prefetch = 0 : i64, scratch_operands = 0 : i64, tpu.core_type = #tpu.core_type<tc>, window_params = [{transform_indices = @transform_0, window_bounds = array<i64: 4, 8, 32>}, {pipeline_mode = #tpu.pipeline_mode<synchronous>, transform_indices = @transform_1, window_bounds = array<i64: 32, 32>}, {pipeline_mode = #tpu.pipeline_mode<synchronous>, transform_indices = @transform_2, window_bounds = array<i64: 1, 32>}, {pipeline_mode = #tpu.pipeline_mode<synchronous>, transform_indices = @transform_3, window_bounds = array<i64: 32, 32>}, {pipeline_mode = #tpu.pipeline_mode<synchronous>, transform_indices = @transform_4, window_bounds = array<i64: 1, 32>}, {pipeline_mode = #tpu.pipeline_mode<synchronous>, transform_indices = @transform_5, window_bounds = array<i64: 32, 32>}, {pipeline_mode = #tpu.pipeline_mode<synchronous>, transform_indices = @transform_6, window_bounds = array<i64: 1, 32>}, {pipeline_mode = #tpu.pipeline_mode<synchronous>, transform_indices = @transform_7, window_bounds = array<i64: 32, 32>}, {pipeline_mode = #tpu.pipeline_mode<synchronous>, transform_indices = @transform_8, window_bounds = array<i64: 1, 32>}, {pipeline_mode = #tpu.pipeline_mode<synchronous>, transform_indices = @transform_9, window_bounds = array<i64: 32, 32>}, {pipeline_mode = #tpu.pipeline_mode<synchronous>, transform_indices = @transform_10, window_bounds = array<i64: 1, 32>}, {pipeline_mode = #tpu.pipeline_mode<synchronous>, transform_indices = @transform_11, window_bounds = array<i64: 32, 128>}, {pipeline_mode = #tpu.pipeline_mode<synchronous>, transform_indices = @transform_12, window_bounds = array<i64: 1, 128>}, {transform_indices = @transform_13, window_bounds = array<i64: 4, 1, 128>}]} {
    %c0 = arith.constant 0 : index
    %c0_0 = arith.constant 0 : index
    %c0_1 = arith.constant 0 : index
    %0 = vector.load %arg1[%c0, %c0_0, %c0_1] : memref<4x8x32xf32, #tpu.memory_space<vmem>>, vector<4x8x32xf32>
    %1 = vector.shape_cast %0 : vector<4x8x32xf32> to vector<32x32xf32>
    %c0_2 = arith.constant 0 : index
    %c0_3 = arith.constant 0 : index
    %2 = vector.load %arg2[%c0_2, %c0_3] : memref<32x32xf32, #tpu.memory_space<vmem>>, vector<32x32xf32>
    %cst = arith.constant dense<0.000000e+00> : vector<32x32xf32>
    %3 = tpu.matmul %1, %2, %cst {dimension_numbers = #tpu.dot_dimension_numbers<[1], [0], [0], [1], [0, 0, 1, 1], [], []>} : vector<32x32xf32>, vector<32x32xf32>, vector<32x32xf32> -> vector<32x32xf32>
    %c0_4 = arith.constant 0 : index
    %c0_5 = arith.constant 0 : index
    %4 = vector.load %arg3[%c0_4, %c0_5] : memref<1x32xf32, #tpu.memory_space<vmem>>, vector<1x32xf32>
    %5 = vector.broadcast %4 : vector<1x32xf32> to vector<32x32xf32>
    %6 = arith.addf %3, %5 : vector<32x32xf32>
    %c0_6 = arith.constant 0 : index
    %c0_7 = arith.constant 0 : index
    %7 = vector.load %arg4[%c0_6, %c0_7] : memref<32x32xf32, #tpu.memory_space<vmem>>, vector<32x32xf32>
    %cst_8 = arith.constant dense<0.000000e+00> : vector<32x32xf32>
    %8 = tpu.matmul %6, %7, %cst_8 {dimension_numbers = #tpu.dot_dimension_numbers<[1], [0], [0], [1], [0, 0, 1, 1], [], []>} : vector<32x32xf32>, vector<32x32xf32>, vector<32x32xf32> -> vector<32x32xf32>
    %c0_9 = arith.constant 0 : index
    %c0_10 = arith.constant 0 : index
    %9 = vector.load %arg5[%c0_9, %c0_10] : memref<1x32xf32, #tpu.memory_space<vmem>>, vector<1x32xf32>
    %10 = vector.broadcast %9 : vector<1x32xf32> to vector<32x32xf32>
    %11 = arith.addf %8, %10 : vector<32x32xf32>
    %c0_11 = arith.constant 0 : index
    %c0_12 = arith.constant 0 : index
    %12 = vector.load %arg6[%c0_11, %c0_12] : memref<32x32xf32, #tpu.memory_space<vmem>>, vector<32x32xf32>
    %cst_13 = arith.constant dense<0.000000e+00> : vector<32x32xf32>
    %13 = tpu.matmul %6, %12, %cst_13 {dimension_numbers = #tpu.dot_dimension_numbers<[1], [0], [0], [1], [0, 0, 1, 1], [], []>} : vector<32x32xf32>, vector<32x32xf32>, vector<32x32xf32> -> vector<32x32xf32>
    %c0_14 = arith.constant 0 : index
    %c0_15 = arith.constant 0 : index
    %14 = vector.load %arg7[%c0_14, %c0_15] : memref<1x32xf32, #tpu.memory_space<vmem>>, vector<1x32xf32>
    %15 = vector.broadcast %14 : vector<1x32xf32> to vector<32x32xf32>
    %16 = arith.addf %13, %15 : vector<32x32xf32>
    %c0_16 = arith.constant 0 : index
    %c0_17 = arith.constant 0 : index
    %17 = vector.load %arg8[%c0_16, %c0_17] : memref<32x32xf32, #tpu.memory_space<vmem>>, vector<32x32xf32>
    %cst_18 = arith.constant dense<0.000000e+00> : vector<32x32xf32>
    %18 = tpu.matmul %6, %17, %cst_18 {dimension_numbers = #tpu.dot_dimension_numbers<[1], [0], [0], [1], [0, 0, 1, 1], [], []>} : vector<32x32xf32>, vector<32x32xf32>, vector<32x32xf32> -> vector<32x32xf32>
    %c0_19 = arith.constant 0 : index
    %c0_20 = arith.constant 0 : index
    %19 = vector.load %arg9[%c0_19, %c0_20] : memref<1x32xf32, #tpu.memory_space<vmem>>, vector<1x32xf32>
    %20 = vector.broadcast %19 : vector<1x32xf32> to vector<32x32xf32>
    %21 = arith.addf %18, %20 : vector<32x32xf32>
    %22 = vector.shape_cast %11 : vector<32x32xf32> to vector<4x8x32xf32>
    %23 = vector.shape_cast %16 : vector<32x32xf32> to vector<4x8x32xf32>
    %24 = vector.shape_cast %21 : vector<32x32xf32> to vector<4x8x32xf32>
    %cst_21 = arith.constant 0.000000e+00 : f32
    %25 = vector.broadcast %cst_21 : f32 to vector<4x32xf32>
    %26 = vector.extract_strided_slice %22 {offsets = [0, 0, 0], sizes = [4, 8, 8], strides = [1, 1, 1]} : vector<4x8x32xf32> to vector<4x8x8xf32>
    %27 = vector.extract_strided_slice %23 {offsets = [0, 0, 0], sizes = [4, 8, 8], strides = [1, 1, 1]} : vector<4x8x32xf32> to vector<4x8x8xf32>
    %28 = vector.extract_strided_slice %24 {offsets = [0, 0, 0], sizes = [4, 8, 8], strides = [1, 1, 1]} : vector<4x8x32xf32> to vector<4x8x8xf32>
    "tpu.trace_start"() <{level = 10 : i32, message = "bqd,bkd->bqk"}> : () -> ()
    %cst_22 = arith.constant dense<0.000000e+00> : vector<4x8x8xf32>
    %29 = tpu.matmul %26, %27, %cst_22 {dimension_numbers = #tpu.dot_dimension_numbers<[2], [2], [1], [1], [0, 0, 0, 1, 1, 1], [0], [0]>} : vector<4x8x8xf32>, vector<4x8x8xf32>, vector<4x8x8xf32> -> vector<4x8x8xf32>
    "tpu.trace_stop"() : () -> ()
    %cst_23 = arith.constant dense<0xFF800000> : vector<4x8xf32>
    %30 = vector.multi_reduction <maximumf>, %29, %cst_23 [2] : vector<4x8x8xf32> to vector<4x8xf32>
    %31 = vector.shape_cast %30 : vector<4x8xf32> to vector<4x8x1xf32>
    %32 = vector.broadcast %31 : vector<4x8x1xf32> to vector<4x8x8xf32>
    %33 = arith.subf %29, %32 : vector<4x8x8xf32>
    %34 = math.exp %33 : vector<4x8x8xf32>
    %cst_24 = arith.constant dense<0.000000e+00> : vector<4x8xf32>
    %35 = vector.multi_reduction <add>, %34, %cst_24 [2] : vector<4x8x8xf32> to vector<4x8xf32>
    %36 = vector.shape_cast %35 : vector<4x8xf32> to vector<4x8x1xf32>
    "tpu.trace_start"() <{level = 10 : i32, message = "bqk,bkd->bqd"}> : () -> ()
    %cst_25 = arith.constant dense<0.000000e+00> : vector<4x8x8xf32>
    %37 = tpu.matmul %34, %28, %cst_25 {dimension_numbers = #tpu.dot_dimension_numbers<[2], [1], [1], [2], [0, 0, 0, 1, 1, 2], [0], [0]>} : vector<4x8x8xf32>, vector<4x8x8xf32>, vector<4x8x8xf32> -> vector<4x8x8xf32>
    "tpu.trace_stop"() : () -> ()
    %38 = tpu.reciprocal %36 : vector<4x8x1xf32> -> vector<4x8x1xf32>
    %39 = vector.broadcast %38 : vector<4x8x1xf32> to vector<4x8x8xf32>
    %40 = arith.mulf %37, %39 : vector<4x8x8xf32>
    %cst_26 = arith.constant dense<0.000000e+00> : vector<4x8xf32>
    %41 = vector.multi_reduction <add>, %40, %cst_26 [1] : vector<4x8x8xf32> to vector<4x8xf32>
    %cst_27 = arith.constant 8.000000e+00 : f32
    %42 = vector.broadcast %cst_27 : f32 to vector<4x8xf32>
    %43 = arith.divf %41, %42 : vector<4x8xf32>
    %c0_28 = arith.constant 0 : index
    %c0_29 = arith.constant 0 : index
    %44 = vector.load %arg10[%c0_28, %c0_29] : memref<32x32xf32, #tpu.memory_space<vmem>>, vector<8x32xf32>
    %cst_30 = arith.constant dense<0.000000e+00> : vector<4x32xf32>
    %45 = tpu.matmul %43, %44, %cst_30 {dimension_numbers = #tpu.dot_dimension_numbers<[1], [0], [0], [1], [0, 0, 1, 1], [], []>} : vector<4x8xf32>, vector<8x32xf32>, vector<4x32xf32> -> vector<4x32xf32>
    %46 = arith.addf %25, %45 : vector<4x32xf32>
    %47 = vector.extract_strided_slice %22 {offsets = [0, 0, 8], sizes = [4, 8, 8], strides = [1, 1, 1]} : vector<4x8x32xf32> to vector<4x8x8xf32>
    %48 = vector.extract_strided_slice %23 {offsets = [0, 0, 8], sizes = [4, 8, 8], strides = [1, 1, 1]} : vector<4x8x32xf32> to vector<4x8x8xf32>
    %49 = vector.extract_strided_slice %24 {offsets = [0, 0, 8], sizes = [4, 8, 8], strides = [1, 1, 1]} : vector<4x8x32xf32> to vector<4x8x8xf32>
    "tpu.trace_start"() <{level = 10 : i32, message = "bqd,bkd->bqk"}> : () -> ()
    %cst_31 = arith.constant dense<0.000000e+00> : vector<4x8x8xf32>
    %50 = tpu.matmul %47, %48, %cst_31 {dimension_numbers = #tpu.dot_dimension_numbers<[2], [2], [1], [1], [0, 0, 0, 1, 1, 1], [0], [0]>} : vector<4x8x8xf32>, vector<4x8x8xf32>, vector<4x8x8xf32> -> vector<4x8x8xf32>
    "tpu.trace_stop"() : () -> ()
    %cst_32 = arith.constant dense<0xFF800000> : vector<4x8xf32>
    %51 = vector.multi_reduction <maximumf>, %50, %cst_32 [2] : vector<4x8x8xf32> to vector<4x8xf32>
    %52 = vector.shape_cast %51 : vector<4x8xf32> to vector<4x8x1xf32>
    %53 = vector.broadcast %52 : vector<4x8x1xf32> to vector<4x8x8xf32>
    %54 = arith.subf %50, %53 : vector<4x8x8xf32>
    %55 = math.exp %54 : vector<4x8x8xf32>
    %cst_33 = arith.constant dense<0.000000e+00> : vector<4x8xf32>
    %56 = vector.multi_reduction <add>, %55, %cst_33 [2] : vector<4x8x8xf32> to vector<4x8xf32>
    %57 = vector.shape_cast %56 : vector<4x8xf32> to vector<4x8x1xf32>
    "tpu.trace_start"() <{level = 10 : i32, message = "bqk,bkd->bqd"}> : () -> ()
    %cst_34 = arith.constant dense<0.000000e+00> : vector<4x8x8xf32>
    %58 = tpu.matmul %55, %49, %cst_34 {dimension_numbers = #tpu.dot_dimension_numbers<[2], [1], [1], [2], [0, 0, 0, 1, 1, 2], [0], [0]>} : vector<4x8x8xf32>, vector<4x8x8xf32>, vector<4x8x8xf32> -> vector<4x8x8xf32>
    "tpu.trace_stop"() : () -> ()
    %59 = tpu.reciprocal %57 : vector<4x8x1xf32> -> vector<4x8x1xf32>
    %60 = vector.broadcast %59 : vector<4x8x1xf32> to vector<4x8x8xf32>
    %61 = arith.mulf %58, %60 : vector<4x8x8xf32>
    %cst_35 = arith.constant dense<0.000000e+00> : vector<4x8xf32>
    %62 = vector.multi_reduction <add>, %61, %cst_35 [1] : vector<4x8x8xf32> to vector<4x8xf32>
    %cst_36 = arith.constant 8.000000e+00 : f32
    %63 = vector.broadcast %cst_36 : f32 to vector<4x8xf32>
    %64 = arith.divf %62, %63 : vector<4x8xf32>
    %c8 = arith.constant 8 : index
    %c0_37 = arith.constant 0 : index
    %65 = vector.load %arg10[%c8, %c0_37] : memref<32x32xf32, #tpu.memory_space<vmem>>, vector<8x32xf32>
    %cst_38 = arith.constant dense<0.000000e+00> : vector<4x32xf32>
    %66 = tpu.matmul %64, %65, %cst_38 {dimension_numbers = #tpu.dot_dimension_numbers<[1], [0], [0], [1], [0, 0, 1, 1], [], []>} : vector<4x8xf32>, vector<8x32xf32>, vector<4x32xf32> -> vector<4x32xf32>
    %67 = arith.addf %46, %66 : vector<4x32xf32>
    %68 = vector.extract_strided_slice %22 {offsets = [0, 0, 16], sizes = [4, 8, 8], strides = [1, 1, 1]} : vector<4x8x32xf32> to vector<4x8x8xf32>
    %69 = vector.extract_strided_slice %23 {offsets = [0, 0, 16], sizes = [4, 8, 8], strides = [1, 1, 1]} : vector<4x8x32xf32> to vector<4x8x8xf32>
    %70 = vector.extract_strided_slice %24 {offsets = [0, 0, 16], sizes = [4, 8, 8], strides = [1, 1, 1]} : vector<4x8x32xf32> to vector<4x8x8xf32>
    "tpu.trace_start"() <{level = 10 : i32, message = "bqd,bkd->bqk"}> : () -> ()
    %cst_39 = arith.constant dense<0.000000e+00> : vector<4x8x8xf32>
    %71 = tpu.matmul %68, %69, %cst_39 {dimension_numbers = #tpu.dot_dimension_numbers<[2], [2], [1], [1], [0, 0, 0, 1, 1, 1], [0], [0]>} : vector<4x8x8xf32>, vector<4x8x8xf32>, vector<4x8x8xf32> -> vector<4x8x8xf32>
    "tpu.trace_stop"() : () -> ()
    %cst_40 = arith.constant dense<0xFF800000> : vector<4x8xf32>
    %72 = vector.multi_reduction <maximumf>, %71, %cst_40 [2] : vector<4x8x8xf32> to vector<4x8xf32>
    %73 = vector.shape_cast %72 : vector<4x8xf32> to vector<4x8x1xf32>
    %74 = vector.broadcast %73 : vector<4x8x1xf32> to vector<4x8x8xf32>
    %75 = arith.subf %71, %74 : vector<4x8x8xf32>
    %76 = math.exp %75 : vector<4x8x8xf32>
    %cst_41 = arith.constant dense<0.000000e+00> : vector<4x8xf32>
    %77 = vector.multi_reduction <add>, %76, %cst_41 [2] : vector<4x8x8xf32> to vector<4x8xf32>
    %78 = vector.shape_cast %77 : vector<4x8xf32> to vector<4x8x1xf32>
    "tpu.trace_start"() <{level = 10 : i32, message = "bqk,bkd->bqd"}> : () -> ()
    %cst_42 = arith.constant dense<0.000000e+00> : vector<4x8x8xf32>
    %79 = tpu.matmul %76, %70, %cst_42 {dimension_numbers = #tpu.dot_dimension_numbers<[2], [1], [1], [2], [0, 0, 0, 1, 1, 2], [0], [0]>} : vector<4x8x8xf32>, vector<4x8x8xf32>, vector<4x8x8xf32> -> vector<4x8x8xf32>
    "tpu.trace_stop"() : () -> ()
    %80 = tpu.reciprocal %78 : vector<4x8x1xf32> -> vector<4x8x1xf32>
    %81 = vector.broadcast %80 : vector<4x8x1xf32> to vector<4x8x8xf32>
    %82 = arith.mulf %79, %81 : vector<4x8x8xf32>
    %cst_43 = arith.constant dense<0.000000e+00> : vector<4x8xf32>
    %83 = vector.multi_reduction <add>, %82, %cst_43 [1] : vector<4x8x8xf32> to vector<4x8xf32>
    %cst_44 = arith.constant 8.000000e+00 : f32
    %84 = vector.broadcast %cst_44 : f32 to vector<4x8xf32>
    %85 = arith.divf %83, %84 : vector<4x8xf32>
    %c16 = arith.constant 16 : index
    %c0_45 = arith.constant 0 : index
    %86 = vector.load %arg10[%c16, %c0_45] : memref<32x32xf32, #tpu.memory_space<vmem>>, vector<8x32xf32>
    %cst_46 = arith.constant dense<0.000000e+00> : vector<4x32xf32>
    %87 = tpu.matmul %85, %86, %cst_46 {dimension_numbers = #tpu.dot_dimension_numbers<[1], [0], [0], [1], [0, 0, 1, 1], [], []>} : vector<4x8xf32>, vector<8x32xf32>, vector<4x32xf32> -> vector<4x32xf32>
    %88 = arith.addf %67, %87 : vector<4x32xf32>
    %89 = vector.extract_strided_slice %22 {offsets = [0, 0, 24], sizes = [4, 8, 8], strides = [1, 1, 1]} : vector<4x8x32xf32> to vector<4x8x8xf32>
    %90 = vector.extract_strided_slice %23 {offsets = [0, 0, 24], sizes = [4, 8, 8], strides = [1, 1, 1]} : vector<4x8x32xf32> to vector<4x8x8xf32>
    %91 = vector.extract_strided_slice %24 {offsets = [0, 0, 24], sizes = [4, 8, 8], strides = [1, 1, 1]} : vector<4x8x32xf32> to vector<4x8x8xf32>
    "tpu.trace_start"() <{level = 10 : i32, message = "bqd,bkd->bqk"}> : () -> ()
    %cst_47 = arith.constant dense<0.000000e+00> : vector<4x8x8xf32>
    %92 = tpu.matmul %89, %90, %cst_47 {dimension_numbers = #tpu.dot_dimension_numbers<[2], [2], [1], [1], [0, 0, 0, 1, 1, 1], [0], [0]>} : vector<4x8x8xf32>, vector<4x8x8xf32>, vector<4x8x8xf32> -> vector<4x8x8xf32>
    "tpu.trace_stop"() : () -> ()
    %cst_48 = arith.constant dense<0xFF800000> : vector<4x8xf32>
    %93 = vector.multi_reduction <maximumf>, %92, %cst_48 [2] : vector<4x8x8xf32> to vector<4x8xf32>
    %94 = vector.shape_cast %93 : vector<4x8xf32> to vector<4x8x1xf32>
    %95 = vector.broadcast %94 : vector<4x8x1xf32> to vector<4x8x8xf32>
    %96 = arith.subf %92, %95 : vector<4x8x8xf32>
    %97 = math.exp %96 : vector<4x8x8xf32>
    %cst_49 = arith.constant dense<0.000000e+00> : vector<4x8xf32>
    %98 = vector.multi_reduction <add>, %97, %cst_49 [2] : vector<4x8x8xf32> to vector<4x8xf32>
    %99 = vector.shape_cast %98 : vector<4x8xf32> to vector<4x8x1xf32>
    "tpu.trace_start"() <{level = 10 : i32, message = "bqk,bkd->bqd"}> : () -> ()
    %cst_50 = arith.constant dense<0.000000e+00> : vector<4x8x8xf32>
    %100 = tpu.matmul %97, %91, %cst_50 {dimension_numbers = #tpu.dot_dimension_numbers<[2], [1], [1], [2], [0, 0, 0, 1, 1, 2], [0], [0]>} : vector<4x8x8xf32>, vector<4x8x8xf32>, vector<4x8x8xf32> -> vector<4x8x8xf32>
    "tpu.trace_stop"() : () -> ()
    %101 = tpu.reciprocal %99 : vector<4x8x1xf32> -> vector<4x8x1xf32>
    %102 = vector.broadcast %101 : vector<4x8x1xf32> to vector<4x8x8xf32>
    %103 = arith.mulf %100, %102 : vector<4x8x8xf32>
    %cst_51 = arith.constant dense<0.000000e+00> : vector<4x8xf32>
    %104 = vector.multi_reduction <add>, %103, %cst_51 [1] : vector<4x8x8xf32> to vector<4x8xf32>
    %cst_52 = arith.constant 8.000000e+00 : f32
    %105 = vector.broadcast %cst_52 : f32 to vector<4x8xf32>
    %106 = arith.divf %104, %105 : vector<4x8xf32>
    %c24 = arith.constant 24 : index
    %c0_53 = arith.constant 0 : index
    %107 = vector.load %arg10[%c24, %c0_53] : memref<32x32xf32, #tpu.memory_space<vmem>>, vector<8x32xf32>
    %cst_54 = arith.constant dense<0.000000e+00> : vector<4x32xf32>
    %108 = tpu.matmul %106, %107, %cst_54 {dimension_numbers = #tpu.dot_dimension_numbers<[1], [0], [0], [1], [0, 0, 1, 1], [], []>} : vector<4x8xf32>, vector<8x32xf32>, vector<4x32xf32> -> vector<4x32xf32>
    %109 = arith.addf %88, %108 : vector<4x32xf32>
    %c0_55 = arith.constant 0 : index
    %c0_56 = arith.constant 0 : index
    %110 = vector.load %arg11[%c0_55, %c0_56] : memref<1x32xf32, #tpu.memory_space<vmem>>, vector<1x32xf32>
    %111 = vector.broadcast %110 : vector<1x32xf32> to vector<4x32xf32>
    %112 = arith.addf %109, %111 : vector<4x32xf32>
    %c0_57 = arith.constant 0 : index
    %c0_58 = arith.constant 0 : index
    %113 = vector.load %arg12[%c0_57, %c0_58] : memref<32x128xf32, #tpu.memory_space<vmem>>, vector<32x128xf32>
    %cst_59 = arith.constant dense<0.000000e+00> : vector<4x128xf32>
    %114 = tpu.matmul %112, %113, %cst_59 {dimension_numbers = #tpu.dot_dimension_numbers<[1], [0], [0], [1], [0, 0, 1, 1], [], []>} : vector<4x32xf32>, vector<32x128xf32>, vector<4x128xf32> -> vector<4x128xf32>
    %c0_60 = arith.constant 0 : index
    %c0_61 = arith.constant 0 : index
    %115 = vector.load %arg13[%c0_60, %c0_61] : memref<1x128xf32, #tpu.memory_space<vmem>>, vector<1x128xf32>
    %116 = vector.broadcast %115 : vector<1x128xf32> to vector<4x128xf32>
    %117 = arith.addf %114, %116 : vector<4x128xf32>
    %118 = vector.shape_cast %117 : vector<4x128xf32> to vector<4x1x128xf32>
    %c0_62 = arith.constant 0 : index
    %c0_63 = arith.constant 0 : index
    %c0_64 = arith.constant 0 : index
    %119 = vector.load %arg14[%c0_62, %c0_63, %c0_64] : memref<4x1x128xf32, #tpu.memory_space<vmem>>, vector<4x1x128xf32>
    tpu.vector_store %arg14[%c0_62, %c0_63, %c0_64], %118 {strides = array<i32>} : memref<4x1x128xf32, #tpu.memory_space<vmem>>, vector<4x1x128xf32>,
    return
  }
  func.func @transform_0(%arg0: i32) -> (i32, i32, i32) {
    %c0_i32 = arith.constant 0 : i32
    %c0_i32_0 = arith.constant 0 : i32
    %c0_i32_1 = arith.constant 0 : i32
    return %arg0, %c0_i32, %c0_i32_0 : i32, i32, i32
  }
  func.func @transform_1(%arg0: i32) -> (i32, i32) {
    %c0_i32 = arith.constant 0 : i32
    %c0_i32_0 = arith.constant 0 : i32
    %c0_i32_1 = arith.constant 0 : i32
    return %c0_i32, %c0_i32_0 : i32, i32
  }
  func.func @transform_2(%arg0: i32) -> (i32, i32) {
    %c0_i32 = arith.constant 0 : i32
    %c0_i32_0 = arith.constant 0 : i32
    %c0_i32_1 = arith.constant 0 : i32
    return %c0_i32, %c0_i32_0 : i32, i32
  }
  func.func @transform_3(%arg0: i32) -> (i32, i32) {
    %c0_i32 = arith.constant 0 : i32
    %c0_i32_0 = arith.constant 0 : i32
    %c0_i32_1 = arith.constant 0 : i32
    return %c0_i32, %c0_i32_0 : i32, i32
  }
  func.func @transform_4(%arg0: i32) -> (i32, i32) {
    %c0_i32 = arith.constant 0 : i32
    %c0_i32_0 = arith.constant 0 : i32
    %c0_i32_1 = arith.constant 0 : i32
    return %c0_i32, %c0_i32_0 : i32, i32
  }
  func.func @transform_5(%arg0: i32) -> (i32, i32) {
    %c0_i32 = arith.constant 0 : i32
    %c0_i32_0 = arith.constant 0 : i32
    %c0_i32_1 = arith.constant 0 : i32
    return %c0_i32, %c0_i32_0 : i32, i32
  }
  func.func @transform_6(%arg0: i32) -> (i32, i32) {
    %c0_i32 = arith.constant 0 : i32
    %c0_i32_0 = arith.constant 0 : i32
    %c0_i32_1 = arith.constant 0 : i32
    return %c0_i32, %c0_i32_0 : i32, i32
  }
  func.func @transform_7(%arg0: i32) -> (i32, i32) {
    %c0_i32 = arith.constant 0 : i32
    %c0_i32_0 = arith.constant 0 : i32
    %c0_i32_1 = arith.constant 0 : i32
    return %c0_i32, %c0_i32_0 : i32, i32
  }
  func.func @transform_8(%arg0: i32) -> (i32, i32) {
    %c0_i32 = arith.constant 0 : i32
    %c0_i32_0 = arith.constant 0 : i32
    %c0_i32_1 = arith.constant 0 : i32
    return %c0_i32, %c0_i32_0 : i32, i32
  }
  func.func @transform_9(%arg0: i32) -> (i32, i32) {
    %c0_i32 = arith.constant 0 : i32
    %c0_i32_0 = arith.constant 0 : i32
    %c0_i32_1 = arith.constant 0 : i32
    return %c0_i32, %c0_i32_0 : i32, i32
  }
  func.func @transform_10(%arg0: i32) -> (i32, i32) {
    %c0_i32 = arith.constant 0 : i32
    %c0_i32_0 = arith.constant 0 : i32
    %c0_i32_1 = arith.constant 0 : i32
    return %c0_i32, %c0_i32_0 : i32, i32
  }
  func.func @transform_11(%arg0: i32) -> (i32, i32) {
    %c0_i32 = arith.constant 0 : i32
    %c0_i32_0 = arith.constant 0 : i32
    %c0_i32_1 = arith.constant 0 : i32
    return %c0_i32, %c0_i32_0 : i32, i32
  }
  func.func @transform_12(%arg0: i32) -> (i32, i32) {
    %c0_i32 = arith.constant 0 : i32
    %c0_i32_0 = arith.constant 0 : i32
    %c0_i32_1 = arith.constant 0 : i32
    return %c0_i32, %c0_i32_0 : i32, i32
  }
  func.func @transform_13(%arg0: i32) -> (i32, i32, i32) {
    %c0_i32 = arith.constant 0 : i32
    %c0_i32_0 = arith.constant 0 : i32
    %c0_i32_1 = arith.constant 0 : i32
    return %arg0, %c0_i32, %c0_i32_0 : i32, i32, i32
  }
}

</mosaic_0001>

<llo_original>
// kernel: tpu_custom_call.1
$region0: #{tpu_custom_call.1}
  #allocation0 [shape = 'u32[]', space=smem, size = 0x4, offset = 0x4, fixed_abs, tag = 'smem constant byte address 0x4 - core index']
  #allocation1 [shape = 'u32[72,128]{1,0:T(1,128)}', space=vmem, size = 0x9000, scoped, tag = 'internal scratch']
  %s0 = inlined_call_operand.hbm [shape: f32[8,8,32], index: 0, kind: input, shape index: {}]
  %s1 = inlined_call_operand.hbm [shape: f32[32,32], index: 1, kind: input, shape index: {}]
  %s2 = inlined_call_operand.vmem [shape: f32[1,32], index: 2, kind: input, shape index: {}]
  %s3 = inlined_call_operand.hbm [shape: f32[32,32], index: 3, kind: input, shape index: {}]
  %s4 = inlined_call_operand.vmem [shape: f32[1,32], index: 4, kind: input, shape index: {}]
  %s5 = inlined_call_operand.hbm [shape: f32[32,32], index: 5, kind: input, shape index: {}]
  %s6 = inlined_call_operand.vmem [shape: f32[1,32], index: 6, kind: input, shape index: {}]
  %s7 = inlined_call_operand.hbm [shape: f32[32,32], index: 7, kind: input, shape index: {}]
  %s8 = inlined_call_operand.vmem [shape: f32[1,32], index: 8, kind: input, shape index: {}]
  %s9 = inlined_call_operand.hbm [shape: f32[32,32], index: 9, kind: input, shape index: {}]
  %s10 = inlined_call_operand.vmem [shape: f32[1,32], index: 10, kind: input, shape index: {}]
  %s11 = inlined_call_operand.hbm [shape: f32[32,128], index: 11, kind: input, shape index: {}]
  %s12 = inlined_call_operand.vmem [shape: f32[1,128], index: 12, kind: input, shape index: {}]
  %s13 = inlined_call_operand.hbm [shape: f32[8,1,128], index: 13, kind: output, shape index: {}]
  %s14 = sld [smem:[#allocation0]]
  $region113: #{tpu_custom_call.1} parent=0
    _
  %s16 = ssub.s32 1, %s14
  %s17 = scalar_select 0, %s16, %s14
  $region1: #{tpu_custom_call.1} parent=0
    #allocation2 [shape = 'u8[32768]{0}', space=vmem, size = 0x8000, scoped, tag = 'input window, operand 0']
    #allocation3 [shape = 's32[2]{0}', space=sflag, size = 0x8, scoped, tag = 'scoped memory for tpu_custom_call.1']
    #allocation4 [shape = 's32[2]{0}', space=sflag, size = 0x8, scoped, tag = 'scoped memory for tpu_custom_call.1']
    #allocation5 [shape = 'u8[16384]{0}', space=vmem, size = 0x4000, scoped, tag = 'input window, operand 1, single buffered']
    #allocation6 [shape = 's32[1]{0}', space=sflag, size = 0x4, scoped, tag = 'scoped memory for tpu_custom_call.1']
    #allocation7 [shape = 'u8[16384]{0}', space=vmem, size = 0x4000, scoped, tag = 'input window, operand 3, single buffered']
    #allocation8 [shape = 'u8[16384]{0}', space=vmem, size = 0x4000, scoped, tag = 'input window, operand 5, single buffered']
    #allocation9 [shape = 's32[1]{0}', space=sflag, size = 0x4, scoped, tag = 'scoped memory for tpu_custom_call.1']
    #allocation10 [shape = 'u8[16384]{0}', space=vmem, size = 0x4000, scoped, tag = 'input window, operand 7, single buffered']
    #allocation11 [shape = 'u8[16384]{0}', space=vmem, size = 0x4000, scoped, tag = 'input window, operand 9, single buffered']
    #allocation12 [shape = 's32[1]{0}', space=sflag, size = 0x4, scoped, tag = 'scoped memory for tpu_custom_call.1']
    #allocation13 [shape = 'u8[16384]{0}', space=vmem, size = 0x4000, scoped, tag = 'input window, operand 11, single buffered']
    #allocation14 [shape = 'u8[4096]{0}', space=vmem, size = 0x1000, scoped, tag = 'output window, operand 0']
    %18 = vsyncpa [#allocation3], 0
    %s19 = scalar_lea.sflag [#allocation3], 1
    %20 = vsyncpa %s19, 0
    %21 = vsyncpa [#allocation6], 0
    %22 = vsyncpa [#allocation9], 0
    %23 = vsyncpa [#allocation12], 0
    %24 = vsyncpa [#allocation4], 0
    %s25 = scalar_lea.sflag [#allocation4], 1
    %26 = vsyncpa %s25, 0
    loop: start=0, step=1, limit=4
    $region2: #{tpu_custom_call.1} parent=1 // loop_pre_header
      _
    $region3: #{tpu_custom_call.1} parent=1 // loop_header
      %s28 = sphi 0, %s32
      %p29 = scmp.ge.s32.totalorder %s28, 4
      %s38 = sphi 0, %s40
      %s41 = sphi 0, %s38
      %s42 = sphi 0, %s41
      %s58 = sphi 0, %s42
      %s62 = sphi 0, %s62
      %s64 = sphi 0, %s62
      %s65 = sphi 0, %s64
      %s79 = sphi 0, %s65
      %s83 = sphi 0, %s83
      %s85 = sphi 0, %s83
      %s86 = sphi 0, %s85
      %s100 = sphi 0, %s86
      %s104 = sphi 0, %s104
      %s106 = sphi 0, %s104
      %s107 = sphi 0, %s106
      %s121 = sphi 0, %s107
      %s125 = sphi 0, %s125
      %s127 = sphi 0, %s125
      %s128 = sphi 0, %s127
      %s142 = sphi 0, %s128
      %s146 = sphi 0, %s146
      %s148 = sphi 0, %s146
      %s149 = sphi 0, %s148
      %s163 = sphi 0, %s149
      %s167 = sphi 0, %s167
      %s169 = sphi 0, %s167
      %s170 = sphi 0, %s169
      %s184 = sphi 0, %s170
      %s188 = sphi 0, %s188
      %s190 = sphi 0, %s188
      %s191 = sphi 0, %s190
      %s205 = sphi 0, %s191
      %s209 = sphi 0, %s209
      %s211 = sphi 0, %s209
      %s212 = sphi 0, %s211
      %s226 = sphi 0, %s212
      %s230 = sphi 0, %s230
      %s232 = sphi 0, %s230
      %s233 = sphi 0, %s232
      %s247 = sphi 0, %s233
      %s251 = sphi 0, %s251
      %s253 = sphi 0, %s251
      %s254 = sphi 0, %s253
      %s268 = sphi 0, %s254
      %s272 = sphi 0, %s272
      %s274 = sphi 0, %s272
      %s275 = sphi 0, %s274
      %s289 = sphi 0, %s275
      %s293 = sphi 0, %s293
      %s295 = sphi 0, %s293
      %s296 = sphi 0, %s295
      %s310 = sphi 0, %s296
      %s316 = sphi 0, %s318
      %s319 = sphi 0, %s316
      %s320 = sphi 0, %s319
      %s336 = sphi 0, %s320
    $region4: #{tpu_custom_call.1} parent=1 // loop_header_branch
      %31 = sbr.rel (%p29) target = $region8
    $region5: #{tpu_custom_call.1} parent=1 // loop_body
      %s33 = ssub.s32 %s28, 1
      %s34 = ssub.s32 %s28, 2
      %s35 = sadd.s32 %s28, 1
      %s36 = ssub.s32 %s28, %s35
      %p37 = scmp.eq.s32.totalorder %s36, 0
      %s39 = sadd.s32 %s38, 1
      %s40 = scalar_select %p37, %s38, %s39
      %p43 = pneg %p37
      %p44 = scmp.eq.s32.totalorder %s28, 1
      %p45 = por %p43, %p44
      %p46 = scmp.ne.s32.totalorder %s38, %s41
      %p47 = scmp.eq.s32.totalorder %s28, 0
      %p48 = por %p46, %p47
      %p49 = scmp.ne.s32.totalorder %s38, %s41
      %p50 = scmp.eq.s32.totalorder %s33, 1
      %p51 = por %p49, %p50
      %p52 = scmp.ne.s32.totalorder %s41, %s42
      %p53 = scmp.eq.s32.totalorder %s33, 0
      %p54 = por %p52, %p53
      %p55 = scmp.ne.s32.totalorder %s41, %s42
      %p56 = scmp.eq.s32.totalorder %s34, 1
      %p57 = por %p55, %p56
      %p59 = scmp.ne.s32.totalorder %s42, %s58
      %p60 = scmp.eq.s32.totalorder %s34, 0
      %p61 = por %p59, %p60
      %s63 = sadd.s32 %s62, 1
      %p66 = scmp.eq.s32.totalorder %s28, 1
      %p67 = scmp.ne.s32.totalorder %s62, %s64
      %p68 = scmp.eq.s32.totalorder %s28, 0
      %p69 = por %p67, %p68
      %p70 = scmp.ne.s32.totalorder %s62, %s64
      %p71 = scmp.eq.s32.totalorder %s33, 1
      %p72 = por %p70, %p71
      %p73 = scmp.ne.s32.totalorder %s64, %s65
      %p74 = scmp.eq.s32.totalorder %s33, 0
      %p75 = por %p73, %p74
      %p76 = scmp.ne.s32.totalorder %s64, %s65
      %p77 = scmp.eq.s32.totalorder %s34, 1
      %p78 = por %p76, %p77
      %p80 = scmp.ne.s32.totalorder %s65, %s79
      %p81 = scmp.eq.s32.totalorder %s34, 0
      %p82 = por %p80, %p81
      %s84 = sadd.s32 %s83, 1
      %p87 = scmp.eq.s32.totalorder %s28, 1
      %p88 = scmp.ne.s32.totalorder %s83, %s85
      %p89 = scmp.eq.s32.totalorder %s28, 0
      %p90 = por %p88, %p89
      %p91 = scmp.ne.s32.totalorder %s83, %s85
      %p92 = scmp.eq.s32.totalorder %s33, 1
      %p93 = por %p91, %p92
      %p94 = scmp.ne.s32.totalorder %s85, %s86
      %p95 = scmp.eq.s32.totalorder %s33, 0
      %p96 = por %p94, %p95
      %p97 = scmp.ne.s32.totalorder %s85, %s86
      %p98 = scmp.eq.s32.totalorder %s34, 1
      %p99 = por %p97, %p98
      %p101 = scmp.ne.s32.totalorder %s86, %s100
      %p102 = scmp.eq.s32.totalorder %s34, 0
      %p103 = por %p101, %p102
      %s105 = sadd.s32 %s104, 1
      %p108 = scmp.eq.s32.totalorder %s28, 1
      %p109 = scmp.ne.s32.totalorder %s104, %s106
      %p110 = scmp.eq.s32.totalorder %s28, 0
      %p111 = por %p109, %p110
      %p112 = scmp.ne.s32.totalorder %s104, %s106
      %p113 = scmp.eq.s32.totalorder %s33, 1
      %p114 = por %p112, %p113
      %p115 = scmp.ne.s32.totalorder %s106, %s107
      %p116 = scmp.eq.s32.totalorder %s33, 0
      %p117 = por %p115, %p116
      %p118 = scmp.ne.s32.totalorder %s106, %s107
      %p119 = scmp.eq.s32.totalorder %s34, 1
      %p120 = por %p118, %p119
      %p122 = scmp.ne.s32.totalorder %s107, %s121
      %p123 = scmp.eq.s32.totalorder %s34, 0
      %p124 = por %p122, %p123
      %s126 = sadd.s32 %s125, 1
      %p129 = scmp.eq.s32.totalorder %s28, 1
      %p130 = scmp.ne.s32.totalorder %s125, %s127
      %p131 = scmp.eq.s32.totalorder %s28, 0
      %p132 = por %p130, %p131
      %p133 = scmp.ne.s32.totalorder %s125, %s127
      %p134 = scmp.eq.s32.totalorder %s33, 1
      %p135 = por %p133, %p134
      %p136 = scmp.ne.s32.totalorder %s127, %s128
      %p137 = scmp.eq.s32.totalorder %s33, 0
      %p138 = por %p136, %p137
      %p139 = scmp.ne.s32.totalorder %s127, %s128
      %p140 = scmp.eq.s32.totalorder %s34, 1
      %p141 = por %p139, %p140
      %p143 = scmp.ne.s32.totalorder %s128, %s142
      %p144 = scmp.eq.s32.totalorder %s34, 0
      %p145 = por %p143, %p144
      %s147 = sadd.s32 %s146, 1
      %p150 = scmp.eq.s32.totalorder %s28, 1
      %p151 = scmp.ne.s32.totalorder %s146, %s148
      %p152 = scmp.eq.s32.totalorder %s28, 0
      %p153 = por %p151, %p152
      %p154 = scmp.ne.s32.totalorder %s146, %s148
      %p155 = scmp.eq.s32.totalorder %s33, 1
      %p156 = por %p154, %p155
      %p157 = scmp.ne.s32.totalorder %s148, %s149
      %p158 = scmp.eq.s32.totalorder %s33, 0
      %p159 = por %p157, %p158
      %p160 = scmp.ne.s32.totalorder %s148, %s149
      %p161 = scmp.eq.s32.totalorder %s34, 1
      %p162 = por %p160, %p161
      %p164 = scmp.ne.s32.totalorder %s149, %s163
      %p165 = scmp.eq.s32.totalorder %s34, 0
      %p166 = por %p164, %p165
      %s168 = sadd.s32 %s167, 1
      %p171 = scmp.eq.s32.totalorder %s28, 1
      %p172 = scmp.ne.s32.totalorder %s167, %s169
      %p173 = scmp.eq.s32.totalorder %s28, 0
      %p174 = por %p172, %p173
      %p175 = scmp.ne.s32.totalorder %s167, %s169
      %p176 = scmp.eq.s32.totalorder %s33, 1
      %p177 = por %p175, %p176
      %p178 = scmp.ne.s32.totalorder %s169, %s170
      %p179 = scmp.eq.s32.totalorder %s33, 0
      %p180 = por %p178, %p179
      %p181 = scmp.ne.s32.totalorder %s169, %s170
      %p182 = scmp.eq.s32.totalorder %s34, 1
      %p183 = por %p181, %p182
      %p185 = scmp.ne.s32.totalorder %s170, %s184
      %p186 = scmp.eq.s32.totalorder %s34, 0
      %p187 = por %p185, %p186
      %s189 = sadd.s32 %s188, 1
      %p192 = scmp.eq.s32.totalorder %s28, 1
      %p193 = scmp.ne.s32.totalorder %s188, %s190
      %p194 = scmp.eq.s32.totalorder %s28, 0
      %p195 = por %p193, %p194
      %p196 = scmp.ne.s32.totalorder %s188, %s190
      %p197 = scmp.eq.s32.totalorder %s33, 1
      %p198 = por %p196, %p197
      %p199 = scmp.ne.s32.totalorder %s190, %s191
      %p200 = scmp.eq.s32.totalorder %s33, 0
      %p201 = por %p199, %p200
      %p202 = scmp.ne.s32.totalorder %s190, %s191
      %p203 = scmp.eq.s32.totalorder %s34, 1
      %p204 = por %p202, %p203
      %p206 = scmp.ne.s32.totalorder %s191, %s205
      %p207 = scmp.eq.s32.totalorder %s34, 0
      %p208 = por %p206, %p207
      %s210 = sadd.s32 %s209, 1
      %p213 = scmp.eq.s32.totalorder %s28, 1
      %p214 = scmp.ne.s32.totalorder %s209, %s211
      %p215 = scmp.eq.s32.totalorder %s28, 0
      %p216 = por %p214, %p215
      %p217 = scmp.ne.s32.totalorder %s209, %s211
      %p218 = scmp.eq.s32.totalorder %s33, 1
      %p219 = por %p217, %p218
      %p220 = scmp.ne.s32.totalorder %s211, %s212
      %p221 = scmp.eq.s32.totalorder %s33, 0
      %p222 = por %p220, %p221
      %p223 = scmp.ne.s32.totalorder %s211, %s212
      %p224 = scmp.eq.s32.totalorder %s34, 1
      %p225 = por %p223, %p224
      %p227 = scmp.ne.s32.totalorder %s212, %s226
      %p228 = scmp.eq.s32.totalorder %s34, 0
      %p229 = por %p227, %p228
      %s231 = sadd.s32 %s230, 1
      %p234 = scmp.eq.s32.totalorder %s28, 1
      %p235 = scmp.ne.s32.totalorder %s230, %s232
      %p236 = scmp.eq.s32.totalorder %s28, 0
      %p237 = por %p235, %p236
      %p238 = scmp.ne.s32.totalorder %s230, %s232
      %p239 = scmp.eq.s32.totalorder %s33, 1
      %p240 = por %p238, %p239
      %p241 = scmp.ne.s32.totalorder %s232, %s233
      %p242 = scmp.eq.s32.totalorder %s33, 0
      %p243 = por %p241, %p242
      %p244 = scmp.ne.s32.totalorder %s232, %s233
      %p245 = scmp.eq.s32.totalorder %s34, 1
      %p246 = por %p244, %p245
      %p248 = scmp.ne.s32.totalorder %s233, %s247
      %p249 = scmp.eq.s32.totalorder %s34, 0
      %p250 = por %p248, %p249
      %s252 = sadd.s32 %s251, 1
      %p255 = scmp.eq.s32.totalorder %s28, 1
      %p256 = scmp.ne.s32.totalorder %s251, %s253
      %p257 = scmp.eq.s32.totalorder %s28, 0
      %p258 = por %p256, %p257
      %p259 = scmp.ne.s32.totalorder %s251, %s253
      %p260 = scmp.eq.s32.totalorder %s33, 1
      %p261 = por %p259, %p260
      %p262 = scmp.ne.s32.totalorder %s253, %s254
      %p263 = scmp.eq.s32.totalorder %s33, 0
      %p264 = por %p262, %p263
      %p265 = scmp.ne.s32.totalorder %s253, %s254
      %p266 = scmp.eq.s32.totalorder %s34, 1
      %p267 = por %p265, %p266
      %p269 = scmp.ne.s32.totalorder %s254, %s268
      %p270 = scmp.eq.s32.totalorder %s34, 0
      %p271 = por %p269, %p270
      %s273 = sadd.s32 %s272, 1
      %p276 = scmp.eq.s32.totalorder %s28, 1
      %p277 = scmp.ne.s32.totalorder %s272, %s274
      %p278 = scmp.eq.s32.totalorder %s28, 0
      %p279 = por %p277, %p278
      %p280 = scmp.ne.s32.totalorder %s272, %s274
      %p281 = scmp.eq.s32.totalorder %s33, 1
      %p282 = por %p280, %p281
      %p283 = scmp.ne.s32.totalorder %s274, %s275
      %p284 = scmp.eq.s32.totalorder %s33, 0
      %p285 = por %p283, %p284
      %p286 = scmp.ne.s32.totalorder %s274, %s275
      %p287 = scmp.eq.s32.totalorder %s34, 1
      %p288 = por %p286, %p287
      %p290 = scmp.ne.s32.totalorder %s275, %s289
      %p291 = scmp.eq.s32.totalorder %s34, 0
      %p292 = por %p290, %p291
      %s294 = sadd.s32 %s293, 1
      %p297 = scmp.eq.s32.totalorder %s28, 1
      %p298 = scmp.ne.s32.totalorder %s293, %s295
      %p299 = scmp.eq.s32.totalorder %s28, 0
      %p300 = por %p298, %p299
      %p301 = scmp.ne.s32.totalorder %s293, %s295
      %p302 = scmp.eq.s32.totalorder %s33, 1
      %p303 = por %p301, %p302
      %p304 = scmp.ne.s32.totalorder %s295, %s296
      %p305 = scmp.eq.s32.totalorder %s33, 0
      %p306 = por %p304, %p305
      %p307 = scmp.ne.s32.totalorder %s295, %s296
      %p308 = scmp.eq.s32.totalorder %s34, 1
      %p309 = por %p307, %p308
      %p311 = scmp.ne.s32.totalorder %s296, %s310
      %p312 = scmp.eq.s32.totalorder %s34, 0
      %p313 = por %p311, %p312
      %s314 = ssub.s32 %s28, %s35
      %p315 = scmp.eq.s32.totalorder %s314, 0
      %s317 = sadd.s32 %s316, 1
      %s318 = scalar_select %p315, %s316, %s317
      %p321 = pneg %p315
      %p322 = scmp.eq.s32.totalorder %s28, 1
      %p323 = por %p321, %p322
      %p324 = scmp.ne.s32.totalorder %s316, %s319
      %p325 = scmp.eq.s32.totalorder %s28, 0
      %p326 = por %p324, %p325
      %p327 = scmp.ne.s32.totalorder %s316, %s319
      %p328 = scmp.eq.s32.totalorder %s33, 1
      %p329 = por %p327, %p328
      %p330 = scmp.ne.s32.totalorder %s319, %s320
      %p331 = scmp.eq.s32.totalorder %s33, 0
      %p332 = por %p330, %p331
      %p333 = scmp.ne.s32.totalorder %s319, %s320
      %p334 = scmp.eq.s32.totalorder %s34, 1
      %p335 = por %p333, %p334
      %p337 = scmp.ne.s32.totalorder %s320, %s336
      %p338 = scmp.eq.s32.totalorder %s34, 0
      %p339 = por %p337, %p338
      %p340 = scmp.le.s32.totalorder 1, %s28
      %p341 = scmp.lt.s32.totalorder %s28, 3
      %p342 = pnand %p340, %p341
      %p343 = pneg %p342
      // Predicated region
      $region9: #{tpu_custom_call.1} parent=5 // pred_check
        _
      $region10: #{tpu_custom_call.1} parent=5 // pred_check_branch
        %345 = sbr.rel (%p342) target = $region12
      $region11: #{tpu_custom_call.1} parent=5 // pred_region
        %s346 = ssub.s32 %s28, 1
        // Predicated region
        $region13: #{tpu_custom_call.1} parent=11 // pred_check
          %p347 = pneg %p75
        $region14: #{tpu_custom_call.1} parent=11 // pred_check_branch
          %349 = sbr.rel (%p347) target = $region16
        $region15: #{tpu_custom_call.1} parent=11 // pred_region
          %351 = vsyncadd [#allocation6], 0
          %s352 = sshll.u32 %s1, 4
          %s353 = int_to_ptr.hbm [resolvable:$true] %s352
          %s354 = sshll.u32 [#allocation5], 4
          %s355 = int_to_ptr.vmem [resolvable:$true] %s354
          %360 = dma.hbm_to_vmem [thread:$0]  %s353, 512, %s355, [#allocation6], 128, 128, 8
        $region16: #{tpu_custom_call.1} parent=11 // pred_fallthru
          _
        // Predicated region
        $region17: #{tpu_custom_call.1} parent=11 // pred_check
          %p361 = pneg %p96
        $region18: #{tpu_custom_call.1} parent=11 // pred_check_branch
          %363 = sbr.rel (%p361) target = $region20
        $region19: #{tpu_custom_call.1} parent=11 // pred_region
          _
        $region20: #{tpu_custom_call.1} parent=11 // pred_fallthru
          _
        // Predicated region
        $region21: #{tpu_custom_call.1} parent=11 // pred_check
          %p364 = pneg %p117
        $region22: #{tpu_custom_call.1} parent=11 // pred_check_branch
          %366 = sbr.rel (%p364) target = $region24
        $region23: #{tpu_custom_call.1} parent=11 // pred_region
          %368 = vsyncadd [#allocation6], 0
          %s369 = sshll.u32 %s3, 4
          %s370 = int_to_ptr.hbm [resolvable:$true] %s369
          %s371 = sshll.u32 [#allocation7], 4
          %s372 = int_to_ptr.vmem [resolvable:$true] %s371
          %377 = dma.hbm_to_vmem [thread:$0]  %s370, 512, %s372, [#allocation6], 128, 128, 8
        $region24: #{tpu_custom_call.1} parent=11 // pred_fallthru
          _
        // Predicated region
        $region25: #{tpu_custom_call.1} parent=11 // pred_check
          %p378 = pneg %p138
        $region26: #{tpu_custom_call.1} parent=11 // pred_check_branch
          %380 = sbr.rel (%p378) target = $region28
        $region27: #{tpu_custom_call.1} parent=11 // pred_region
          _
        $region28: #{tpu_custom_call.1} parent=11 // pred_fallthru
          _
        // Predicated region
        $region29: #{tpu_custom_call.1} parent=11 // pred_check
          %p381 = pneg %p159
        $region30: #{tpu_custom_call.1} parent=11 // pred_check_branch
          %383 = sbr.rel (%p381) target = $region32
        $region31: #{tpu_custom_call.1} parent=11 // pred_region
          %385 = vsyncadd [#allocation9], 0
          %s386 = sshll.u32 %s5, 4
          %s387 = int_to_ptr.hbm [resolvable:$true] %s386
          %s388 = sshll.u32 [#allocation8], 4
          %s389 = int_to_ptr.vmem [resolvable:$true] %s388
          %394 = dma.hbm_to_vmem [thread:$0]  %s387, 512, %s389, [#allocation9], 128, 128, 8
        $region32: #{tpu_custom_call.1} parent=11 // pred_fallthru
          _
        // Predicated region
        $region33: #{tpu_custom_call.1} parent=11 // pred_check
          %p395 = pneg %p180
        $region34: #{tpu_custom_call.1} parent=11 // pred_check_branch
          %397 = sbr.rel (%p395) target = $region36
        $region35: #{tpu_custom_call.1} parent=11 // pred_region
          _
        $region36: #{tpu_custom_call.1} parent=11 // pred_fallthru
          _
        // Predicated region
        $region37: #{tpu_custom_call.1} parent=11 // pred_check
          %p398 = pneg %p201
        $region38: #{tpu_custom_call.1} parent=11 // pred_check_branch
          %400 = sbr.rel (%p398) target = $region40
        $region39: #{tpu_custom_call.1} parent=11 // pred_region
          %402 = vsyncadd [#allocation9], 0
          %s403 = sshll.u32 %s7, 4
          %s404 = int_to_ptr.hbm [resolvable:$true] %s403
          %s405 = sshll.u32 [#allocation10], 4
          %s406 = int_to_ptr.vmem [resolvable:$true] %s405
          %411 = dma.hbm_to_vmem [thread:$0]  %s404, 512, %s406, [#allocation9], 128, 128, 8
        $region40: #{tpu_custom_call.1} parent=11 // pred_fallthru
          _
        // Predicated region
        $region41: #{tpu_custom_call.1} parent=11 // pred_check
          %p412 = pneg %p222
        $region42: #{tpu_custom_call.1} parent=11 // pred_check_branch
          %414 = sbr.rel (%p412) target = $region44
        $region43: #{tpu_custom_call.1} parent=11 // pred_region
          _
        $region44: #{tpu_custom_call.1} parent=11 // pred_fallthru
          _
        // Predicated region
        $region45: #{tpu_custom_call.1} parent=11 // pred_check
          %p415 = pneg %p243
        $region46: #{tpu_custom_call.1} parent=11 // pred_check_branch
          %417 = sbr.rel (%p415) target = $region48
        $region47: #{tpu_custom_call.1} parent=11 // pred_region
          %419 = vsyncadd [#allocation12], 0
          %s420 = sshll.u32 %s9, 4
          %s421 = int_to_ptr.hbm [resolvable:$true] %s420
          %s422 = sshll.u32 [#allocation11], 4
          %s423 = int_to_ptr.vmem [resolvable:$true] %s422
          %428 = dma.hbm_to_vmem [thread:$0]  %s421, 512, %s423, [#allocation12], 128, 128, 8
        $region48: #{tpu_custom_call.1} parent=11 // pred_fallthru
          _
        // Predicated region
        $region49: #{tpu_custom_call.1} parent=11 // pred_check
          %p429 = pneg %p264
        $region50: #{tpu_custom_call.1} parent=11 // pred_check_branch
          %431 = sbr.rel (%p429) target = $region52
        $region51: #{tpu_custom_call.1} parent=11 // pred_region
          _
        $region52: #{tpu_custom_call.1} parent=11 // pred_fallthru
          _
        // Predicated region
        $region53: #{tpu_custom_call.1} parent=11 // pred_check
          %p432 = pneg %p285
        $region54: #{tpu_custom_call.1} parent=11 // pred_check_branch
          %434 = sbr.rel (%p432) target = $region56
        $region55: #{tpu_custom_call.1} parent=11 // pred_region
          %436 = vsyncadd [#allocation12], 0
          %s437 = sshll.u32 %s11, 4
          %s438 = int_to_ptr.hbm [resolvable:$true] %s437
          %s439 = sshll.u32 [#allocation13], 4
          %s440 = int_to_ptr.vmem [resolvable:$true] %s439
          %445 = dma.hbm_to_vmem [thread:$0]  %s438, 512, %s440, [#allocation12], 128, 128, 8
        $region56: #{tpu_custom_call.1} parent=11 // pred_fallthru
          _
        // Predicated region
        $region57: #{tpu_custom_call.1} parent=11 // pred_check
          %p446 = pneg %p306
        $region58: #{tpu_custom_call.1} parent=11 // pred_check_branch
          %448 = sbr.rel (%p446) target = $region60
        $region59: #{tpu_custom_call.1} parent=11 // pred_region
          _
        $region60: #{tpu_custom_call.1} parent=11 // pred_fallthru
          _
      $region12: #{tpu_custom_call.1} parent=5 // pred_fallthru
        _
      %p449 = scmp.lt.s32.totalorder %s28, 2
      // Predicated region
      $region61: #{tpu_custom_call.1} parent=5 // pred_check
        %p450 = pneg %p449
      $region62: #{tpu_custom_call.1} parent=5 // pred_check_branch
        %452 = sbr.rel (%p450) target = $region64
      $region63: #{tpu_custom_call.1} parent=5 // pred_region
        // Predicated region
        $region65: #{tpu_custom_call.1} parent=63 // pred_check
          %p453 = pneg %p48
        $region66: #{tpu_custom_call.1} parent=63 // pred_check_branch
          %455 = sbr.rel (%p453) target = $region68
        $region67: #{tpu_custom_call.1} parent=63 // pred_region
          %s456 = sand.u32 %s38, 1
          %s457 = scalar_lea.sflag [#allocation3], %s456
          %s458 = sand.u32 %s38, 1
          %s459 = smul.addr %s458, 32
          %s460 = scalar_lea.vmem [#allocation2], %s459
          %s461 = smul.u32 4, %s28
          %463 = vsyncadd %s457, 0
          %s464 = smul.addr %s461, 8
          %s465 = scalar_lea.hbm %s0, %s464
          %s466 = sshll.u32 %s465, 4
          %s467 = int_to_ptr.hbm [resolvable:$true] %s466
          %s468 = sshll.u32 %s460, 4
          %s469 = int_to_ptr.vmem [resolvable:$true] %s468
          %474 = dma.hbm_to_vmem [thread:$0]  %s467, 512, %s469, %s457, 128, 128, 8
        $region68: #{tpu_custom_call.1} parent=63 // pred_fallthru
          _
      $region64: #{tpu_custom_call.1} parent=5 // pred_fallthru
        _
      %p475 = scmp.le.s32.totalorder 1, %s28
      %p476 = scmp.lt.s32.totalorder %s28, 3
      %p477 = pnand %p475, %p476
      %p478 = pneg %p477
      // Predicated region
      $region69: #{tpu_custom_call.1} parent=5 // pred_check
        _
      $region70: #{tpu_custom_call.1} parent=5 // pred_check_branch
        %480 = sbr.rel (%p477) target = $region72
      $region71: #{tpu_custom_call.1} parent=5 // pred_region
        %s481 = ssub.s32 %s28, 1
        %s482 = sand.u32 %s41, 1
        %s483 = scalar_lea.sflag [#allocation3], %s482
        %s484 = sand.u32 %s41, 1
        %s485 = smul.addr %s484, 32
        %s486 = scalar_lea.vmem [#allocation2], %s485
        // Predicated region
        $region73: #{tpu_custom_call.1} parent=71 // pred_check
          %p487 = pneg %p54
        $region74: #{tpu_custom_call.1} parent=71 // pred_check_branch
          %489 = sbr.rel (%p487) target = $region76
        $region75: #{tpu_custom_call.1} parent=71 // pred_region
          %491 = dma.done %s483, 512
        $region76: #{tpu_custom_call.1} parent=71 // pred_fallthru
          _
        // Predicated region
        $region77: #{tpu_custom_call.1} parent=71 // pred_check
          %p492 = pneg %p75
        $region78: #{tpu_custom_call.1} parent=71 // pred_check_branch
          %494 = sbr.rel (%p492) target = $region80
        $region79: #{tpu_custom_call.1} parent=71 // pred_region
          %496 = dma.done [#allocation6], 512
        $region80: #{tpu_custom_call.1} parent=71 // pred_fallthru
          _
        // Predicated region
        $region81: #{tpu_custom_call.1} parent=71 // pred_check
          %p497 = pneg %p117
        $region82: #{tpu_custom_call.1} parent=71 // pred_check_branch
          %499 = sbr.rel (%p497) target = $region84
        $region83: #{tpu_custom_call.1} parent=71 // pred_region
          %501 = dma.done [#allocation6], 512
        $region84: #{tpu_custom_call.1} parent=71 // pred_fallthru
          _
        // Predicated region
        $region85: #{tpu_custom_call.1} parent=71 // pred_check
          %p502 = pneg %p159
        $region86: #{tpu_custom_call.1} parent=71 // pred_check_branch
          %504 = sbr.rel (%p502) target = $region88
        $region87: #{tpu_custom_call.1} parent=71 // pred_region
          %506 = dma.done [#allocation9], 512
        $region88: #{tpu_custom_call.1} parent=71 // pred_fallthru
          _
        // Predicated region
        $region89: #{tpu_custom_call.1} parent=71 // pred_check
          %p507 = pneg %p201
        $region90: #{tpu_custom_call.1} parent=71 // pred_check_branch
          %509 = sbr.rel (%p507) target = $region92
        $region91: #{tpu_custom_call.1} parent=71 // pred_region
          %511 = dma.done [#allocation9], 512
        $region92: #{tpu_custom_call.1} parent=71 // pred_fallthru
          _
        // Predicated region
        $region93: #{tpu_custom_call.1} parent=71 // pred_check
          %p512 = pneg %p243
        $region94: #{tpu_custom_call.1} parent=71 // pred_check_branch
          %514 = sbr.rel (%p512) target = $region96
        $region95: #{tpu_custom_call.1} parent=71 // pred_region
          %516 = dma.done [#allocation12], 512
        $region96: #{tpu_custom_call.1} parent=71 // pred_fallthru
          _
        // Predicated region
        $region97: #{tpu_custom_call.1} parent=71 // pred_check
          %p517 = pneg %p285
        $region98: #{tpu_custom_call.1} parent=71 // pred_check_branch
          %519 = sbr.rel (%p517) target = $region100
        $region99: #{tpu_custom_call.1} parent=71 // pred_region
          %521 = dma.done [#allocation12], 512
        $region100: #{tpu_custom_call.1} parent=71 // pred_fallthru
          _
        %s522 = sand.u32 %s41, 1
        %s523 = scalar_lea.sflag [#allocation3], %s522
        %s524 = sand.u32 %s41, 1
        %s525 = smul.addr %s524, 32
        %s526 = scalar_lea.vmem [#allocation2], %s525
        %p527 = pneg %p54
        %p528 = pneg %p51
        %p529 = pneg %p75
        %p530 = pneg %p72
        %p531 = pneg %p96
        %p532 = pneg %p93
        %p533 = pneg %p117
        %p534 = pneg %p114
        %p535 = pneg %p138
        %p536 = pneg %p135
        %p537 = pneg %p159
        %p538 = pneg %p156
        %p539 = pneg %p180
        %p540 = pneg %p177
        %p541 = pneg %p201
        %p542 = pneg %p198
        %p543 = pneg %p222
        %p544 = pneg %p219
        %p545 = pneg %p243
        %p546 = pneg %p240
        %p547 = pneg %p264
        %p548 = pneg %p261
        %p549 = pneg %p285
        %p550 = pneg %p282
        %p551 = pneg %p306
        %p552 = pneg %p303
        %p553 = pneg %p332
        %p554 = pneg %p329
        %s555 = sand.u32 %s319, 1
        %s556 = scalar_lea.sflag [#allocation4], %s555
        %s557 = sand.u32 %s319, 1
        %s558 = smul.addr %s557, 4
        %s559 = scalar_lea.vmem [#allocation14], %s558
        %s560 = smul.u32 4, %s33
        %s561 = smul.u32 4, %s33
        %v562 = vld [vmem:[%s486] sm:$0xff]
        %v563 = vld [vmem:[%s486 + $0x8] sm:$0xff]
        %v564 = vld [vmem:[%s486 + $0x10] sm:$0xff]
        %v565 = vld [vmem:[%s486 + $0x18] sm:$0xff]
        %v566 = vld [vmem:[#allocation5] sm:$0xff]
        %v567 = vld [vmem:[#allocation5 + $0x8] sm:$0xff]
        %v568 = vld [vmem:[#allocation5 + $0x10] sm:$0xff]
        %v569 = vld [vmem:[#allocation5 + $0x18] sm:$0xff]
        %v570 = vld [vmem:[%s2] sm:$0x1]
        %v572 = vperm.slane %v570, 0
        %vm574 = vcmask 261120
        %v576 = vsel %vm574, %v562, 0
        %v579 = vsel %vm574, %v563, 0
        %v582 = vsel %vm574, %v564, 0
        %v585 = vsel %vm574, %v565, 0
        %587 = vmatpush.msra.mxu0 0.0
        %588 = vmatpush.msra.mxu0 0.0
        %589 = vmatpush.msra.mxu0 0.0
        %590 = vmatpush.msra.mxu0 0.0
        %591 = vmatpush.msra.mxu0 0.0
        %592 = vmatpush.msra.mxu0 0.0
        %593 = vmatpush.msra.mxu0 0.0
        %594 = vmatpush.msra.mxu0 0.0
        %595 = vmatpush.msra.mxu0 0.0
        %596 = vmatpush.msra.mxu0 0.0
        %597 = vmatpush.msra.mxu0 0.0
        %598 = vmatpush.msra.mxu0 0.0
        %599 = vmatpush.msra.mxu0 %v569
        %600 = vmatpush.msra.mxu0 %v568
        %601 = vmatpush.msra.mxu0 %v567
        %602 = vmatpush.msra.mxu0 %v566
        %603 = vmatmul.f32.gmra.mxu0 %v576
        %v604 = vpop.f32.mrf.mxu0
        %v605 = vadd.f32 %v572, %v604
        %606 = vmatmul.f32.gmra.mxu0 %v579
        %v607 = vpop.f32.mrf.mxu0
        %v608 = vadd.f32 %v572, %v607
        %609 = vmatmul.f32.gmra.mxu0 %v582
        %v610 = vpop.f32.mrf.mxu0
        %v611 = vadd.f32 %v572, %v610
        %612 = vmatmul.f32.gmra.mxu0 %v585
        %v613 = vpop.f32.mrf.mxu0
        %v614 = vadd.f32 %v572, %v613
        %615 = vdwg.mxu0
        %v616 = vld [vmem:[#allocation7] sm:$0xff]
        %v617 = vld [vmem:[#allocation7 + $0x8] sm:$0xff]
        %v618 = vld [vmem:[#allocation7 + $0x10] sm:$0xff]
        %v619 = vld [vmem:[#allocation7 + $0x18] sm:$0xff]
        %v620 = vld [vmem:[%s4] sm:$0x1]
        %v622 = vperm.slane %v620, 0
        %v625 = vsel %vm574, %v605, 0
        %v628 = vsel %vm574, %v608, 0
        %v631 = vsel %vm574, %v611, 0
        %v634 = vsel %vm574, %v614, 0
        %636 = vmatpush.msra.mxu0 0.0
        %637 = vmatpush.msra.mxu0 0.0
        %638 = vmatpush.msra.mxu0 0.0
        %639 = vmatpush.msra.mxu0 0.0
        %640 = vmatpush.msra.mxu0 0.0
        %641 = vmatpush.msra.mxu0 0.0
        %642 = vmatpush.msra.mxu0 0.0
        %643 = vmatpush.msra.mxu0 0.0
        %644 = vmatpush.msra.mxu0 0.0
        %645 = vmatpush.msra.mxu0 0.0
        %646 = vmatpush.msra.mxu0 0.0
        %647 = vmatpush.msra.mxu0 0.0
        %648 = vmatpush.msra.mxu0 %v619
        %649 = vmatpush.msra.mxu0 %v618
        %650 = vmatpush.msra.mxu0 %v617
        %651 = vmatpush.msra.mxu0 %v616
        %652 = vmatmul.f32.gmra.mxu0 %v625
        %v653 = vpop.f32.mrf.mxu0
        %v654 = vadd.f32 %v622, %v653
        %655 = vmatmul.f32.gmra.mxu0 %v628
        %v656 = vpop.f32.mrf.mxu0
        %v657 = vadd.f32 %v622, %v656
        %658 = vmatmul.f32.gmra.mxu0 %v631
        %v659 = vpop.f32.mrf.mxu0
        %v660 = vadd.f32 %v622, %v659
        %661 = vmatmul.f32.gmra.mxu0 %v634
        %v662 = vpop.f32.mrf.mxu0
        %v663 = vadd.f32 %v622, %v662
        %664 = vdwg.mxu0
        %v665 = vld [vmem:[#allocation8] sm:$0xff]
        %v666 = vld [vmem:[#allocation8 + $0x8] sm:$0xff]
        %v667 = vld [vmem:[#allocation8 + $0x10] sm:$0xff]
        %v668 = vld [vmem:[#allocation8 + $0x18] sm:$0xff]
        %v669 = vld [vmem:[%s6] sm:$0x1]
        %v671 = vperm.slane %v669, 0
        %673 = vmatpush.msra.mxu0 0.0
        %674 = vmatpush.msra.mxu0 0.0
        %675 = vmatpush.msra.mxu0 0.0
        %676 = vmatpush.msra.mxu0 0.0
        %677 = vmatpush.msra.mxu0 0.0
        %678 = vmatpush.msra.mxu0 0.0
        %679 = vmatpush.msra.mxu0 0.0
        %680 = vmatpush.msra.mxu0 0.0
        %681 = vmatpush.msra.mxu0 0.0
        %682 = vmatpush.msra.mxu0 0.0
        %683 = vmatpush.msra.mxu0 0.0
        %684 = vmatpush.msra.mxu0 0.0
        %685 = vmatpush.msra.mxu0 %v668
        %686 = vmatpush.msra.mxu0 %v667
        %687 = vmatpush.msra.mxu0 %v666
        %688 = vmatpush.msra.mxu0 %v665
        %689 = vmatmul.f32.gmra.mxu0 %v625
        %v690 = vpop.f32.mrf.mxu0
        %v691 = vadd.f32 %v671, %v690
        %692 = vmatmul.f32.gmra.mxu0 %v628
        %v693 = vpop.f32.mrf.mxu0
        %v694 = vadd.f32 %v671, %v693
        %695 = vmatmul.f32.gmra.mxu0 %v631
        %v696 = vpop.f32.mrf.mxu0
        %v697 = vadd.f32 %v671, %v696
        %698 = vmatmul.f32.gmra.mxu0 %v634
        %v699 = vpop.f32.mrf.mxu0
        %v700 = vadd.f32 %v671, %v699
        %701 = vdwg.mxu0
        %v702 = vld [vmem:[#allocation10] sm:$0xff]
        %v703 = vld [vmem:[#allocation10 + $0x8] sm:$0xff]
        %v704 = vld [vmem:[#allocation10 + $0x10] sm:$0xff]
        %v705 = vld [vmem:[#allocation10 + $0x18] sm:$0xff]
        %v706 = vld [vmem:[%s8] sm:$0x1]
        %v708 = vperm.slane %v706, 0
        %710 = vmatpush.msra.mxu0 0.0
        %711 = vmatpush.msra.mxu0 0.0
        %712 = vmatpush.msra.mxu0 0.0
        %713 = vmatpush.msra.mxu0 0.0
        %714 = vmatpush.msra.mxu0 0.0
        %715 = vmatpush.msra.mxu0 0.0
        %716 = vmatpush.msra.mxu0 0.0
        %717 = vmatpush.msra.mxu0 0.0
        %718 = vmatpush.msra.mxu0 0.0
        %719 = vmatpush.msra.mxu0 0.0
        %720 = vmatpush.msra.mxu0 0.0
        %721 = vmatpush.msra.mxu0 0.0
        %722 = vmatpush.msra.mxu0 %v705
        %723 = vmatpush.msra.mxu0 %v704
        %724 = vmatpush.msra.mxu0 %v703
        %725 = vmatpush.msra.mxu0 %v702
        %726 = vmatmul.f32.gmra.mxu0 %v625
        %v727 = vpop.f32.mrf.mxu0
        %v728 = vadd.f32 %v708, %v727
        %729 = vmatmul.f32.gmra.mxu0 %v628
        %v730 = vpop.f32.mrf.mxu0
        %v731 = vadd.f32 %v708, %v730
        %732 = vmatmul.f32.gmra.mxu0 %v631
        %v733 = vpop.f32.mrf.mxu0
        %v734 = vadd.f32 %v708, %v733
        %735 = vmatmul.f32.gmra.mxu0 %v634
        %v736 = vpop.f32.mrf.mxu0
        %v737 = vadd.f32 %v708, %v736
        %738 = vdwg.mxu0
        %vm739 = vcmask 64512
        %v741 = vsel %vm739, %v654, 0
        %v744 = vsel %vm739, %v691, 0
        %746 = vmatpush.xpose.msra.mxu0 0.0
        %747 = vmatpush.xpose.msra.mxu0 0.0
        %748 = vmatpush.xpose.msra.mxu0 0.0
        %749 = vmatpush.xpose.msra.mxu0 0.0
        %750 = vmatpush.xpose.msra.mxu0 0.0
        %751 = vmatpush.xpose.msra.mxu0 0.0
        %752 = vmatpush.xpose.msra.mxu0 0.0
        %753 = vmatpush.xpose.msra.mxu0 0.0
        %754 = vmatpush.xpose.msra.mxu0 0.0
        %755 = vmatpush.xpose.msra.mxu0 0.0
        %756 = vmatpush.xpose.msra.mxu0 0.0
        %757 = vmatpush.xpose.msra.mxu0 0.0
        %758 = vmatpush.xpose.msra.mxu0 0.0
        %759 = vmatpush.xpose.msra.mxu0 0.0
        %760 = vmatpush.xpose.msra.mxu0 0.0
        %761 = vmatpush.xpose.msra.mxu0 %v744
        %762 = vmatmul.f32.gmra.mxu0 %v741
        %v763 = vpop.f32.mrf.mxu0
        %v764 = vadd.f32 0.0, %v763
        %765 = vdwg.mxu0
        %v767 = vsel %vm739, %v657, 0
        %v770 = vsel %vm739, %v694, 0
        %772 = vmatpush.xpose.msra.mxu0 0.0
        %773 = vmatpush.xpose.msra.mxu0 0.0
        %774 = vmatpush.xpose.msra.mxu0 0.0
        %775 = vmatpush.xpose.msra.mxu0 0.0
        %776 = vmatpush.xpose.msra.mxu0 0.0
        %777 = vmatpush.xpose.msra.mxu0 0.0
        %778 = vmatpush.xpose.msra.mxu0 0.0
        %779 = vmatpush.xpose.msra.mxu0 0.0
        %780 = vmatpush.xpose.msra.mxu0 0.0
        %781 = vmatpush.xpose.msra.mxu0 0.0
        %782 = vmatpush.xpose.msra.mxu0 0.0
        %783 = vmatpush.xpose.msra.mxu0 0.0
        %784 = vmatpush.xpose.msra.mxu0 0.0
        %785 = vmatpush.xpose.msra.mxu0 0.0
        %786 = vmatpush.xpose.msra.mxu0 0.0
        %787 = vmatpush.xpose.msra.mxu0 %v770
        %788 = vmatmul.f32.gmra.mxu0 %v767
        %v789 = vpop.f32.mrf.mxu0
        %v790 = vadd.f32 0.0, %v789
        %791 = vdwg.mxu0
        %v793 = vsel %vm739, %v660, 0
        %v796 = vsel %vm739, %v697, 0
        %798 = vmatpush.xpose.msra.mxu0 0.0
        %799 = vmatpush.xpose.msra.mxu0 0.0
        %800 = vmatpush.xpose.msra.mxu0 0.0
        %801 = vmatpush.xpose.msra.mxu0 0.0
        %802 = vmatpush.xpose.msra.mxu0 0.0
        %803 = vmatpush.xpose.msra.mxu0 0.0
        %804 = vmatpush.xpose.msra.mxu0 0.0
        %805 = vmatpush.xpose.msra.mxu0 0.0
        %806 = vmatpush.xpose.msra.mxu0 0.0
        %807 = vmatpush.xpose.msra.mxu0 0.0
        %808 = vmatpush.xpose.msra.mxu0 0.0
        %809 = vmatpush.xpose.msra.mxu0 0.0
        %810 = vmatpush.xpose.msra.mxu0 0.0
        %811 = vmatpush.xpose.msra.mxu0 0.0
        %812 = vmatpush.xpose.msra.mxu0 0.0
        %813 = vmatpush.xpose.msra.mxu0 %v796
        %814 = vmatmul.f32.gmra.mxu0 %v793
        %v815 = vpop.f32.mrf.mxu0
        %v816 = vadd.f32 0.0, %v815
        %817 = vdwg.mxu0
        %v819 = vsel %vm739, %v663, 0
        %v822 = vsel %vm739, %v700, 0
        %824 = vmatpush.xpose.msra.mxu0 0.0
        %825 = vmatpush.xpose.msra.mxu0 0.0
        %826 = vmatpush.xpose.msra.mxu0 0.0
        %827 = vmatpush.xpose.msra.mxu0 0.0
        %828 = vmatpush.xpose.msra.mxu0 0.0
        %829 = vmatpush.xpose.msra.mxu0 0.0
        %830 = vmatpush.xpose.msra.mxu0 0.0
        %831 = vmatpush.xpose.msra.mxu0 0.0
        %832 = vmatpush.xpose.msra.mxu0 0.0
        %833 = vmatpush.xpose.msra.mxu0 0.0
        %834 = vmatpush.xpose.msra.mxu0 0.0
        %835 = vmatpush.xpose.msra.mxu0 0.0
        %836 = vmatpush.xpose.msra.mxu0 0.0
        %837 = vmatpush.xpose.msra.mxu0 0.0
        %838 = vmatpush.xpose.msra.mxu0 0.0
        %839 = vmatpush.xpose.msra.mxu0 %v822
        %840 = vmatmul.f32.gmra.mxu0 %v819
        %v841 = vpop.f32.mrf.mxu0
        %v842 = vadd.f32 0.0, %v841
        %843 = vdwg.mxu0
        %v844 = vsel %vm739, %v764, -inf
        %845 = vmax.xlane.f32.xlu0 %v844
        %v846 = vpop.xlane.xlu0 %845
        %v847 = vsel %vm739, %v790, -inf
        %848 = vmax.xlane.f32.xlu0 %v847
        %v849 = vpop.xlane.xlu0 %848
        %v850 = vsel %vm739, %v816, -inf
        %851 = vmax.xlane.f32.xlu0 %v850
        %v852 = vpop.xlane.xlu0 %851
        %v853 = vsel %vm739, %v842, -inf
        %854 = vmax.xlane.f32.xlu0 %v853
        %v855 = vpop.xlane.xlu0 %854
        %v856 = vsub.f32 %v764, %v846
        %v857 = vsub.f32 %v790, %v849
        %v858 = vsub.f32 %v816, %v852
        %v859 = vsub.f32 %v842, %v855
        %v860 = vmul.f32 %v856, 1.442695
        %v861 = vpow.pop %v860
        %v862 = vmul.f32 %v857, 1.442695
        %v863 = vpow.pop %v862
        %v864 = vmul.f32 %v858, 1.442695
        %v865 = vpow.pop %v864
        %v866 = vmul.f32 %v859, 1.442695
        %v867 = vpow.pop %v866
        %v868 = vsel %vm739, %v861, 0.0
        %869 = vadd.xlane.f32.xlu0 %v868
        %v870 = vpop.xlane.xlu0 %869
        %v871 = vsel %vm739, %v863, 0.0
        %872 = vadd.xlane.f32.xlu0 %v871
        %v873 = vpop.xlane.xlu0 %872
        %v874 = vsel %vm739, %v865, 0.0
        %875 = vadd.xlane.f32.xlu0 %v874
        %v876 = vpop.xlane.xlu0 %875
        %v877 = vsel %vm739, %v867, 0.0
        %878 = vadd.xlane.f32.xlu0 %v877
        %v879 = vpop.xlane.xlu0 %878
        %v881 = vsel %vm739, %v861, 0
        %883 = vmatpush.msra.mxu0 0.0
        %884 = vmatpush.msra.mxu0 0.0
        %885 = vmatpush.msra.mxu0 0.0
        %886 = vmatpush.msra.mxu0 0.0
        %887 = vmatpush.msra.mxu0 0.0
        %888 = vmatpush.msra.mxu0 0.0
        %889 = vmatpush.msra.mxu0 0.0
        %890 = vmatpush.msra.mxu0 0.0
        %891 = vmatpush.msra.mxu0 0.0
        %892 = vmatpush.msra.mxu0 0.0
        %893 = vmatpush.msra.mxu0 0.0
        %894 = vmatpush.msra.mxu0 0.0
        %895 = vmatpush.msra.mxu0 0.0
        %896 = vmatpush.msra.mxu0 0.0
        %897 = vmatpush.msra.mxu0 0.0
        %898 = vmatpush.msra.mxu0 %v728
        %899 = vmatmul.f32.gmra.mxu0 %v881
        %v900 = vpop.f32.mrf.mxu0
        %v901 = vadd.f32 0.0, %v900
        %902 = vdwg.mxu0
        %v904 = vsel %vm739, %v863, 0
        %906 = vmatpush.msra.mxu0 0.0
        %907 = vmatpush.msra.mxu0 0.0
        %908 = vmatpush.msra.mxu0 0.0
        %909 = vmatpush.msra.mxu0 0.0
        %910 = vmatpush.msra.mxu0 0.0
        %911 = vmatpush.msra.mxu0 0.0
        %912 = vmatpush.msra.mxu0 0.0
        %913 = vmatpush.msra.mxu0 0.0
        %914 = vmatpush.msra.mxu0 0.0
        %915 = vmatpush.msra.mxu0 0.0
        %916 = vmatpush.msra.mxu0 0.0
        %917 = vmatpush.msra.mxu0 0.0
        %918 = vmatpush.msra.mxu0 0.0
        %919 = vmatpush.msra.mxu0 0.0
        %920 = vmatpush.msra.mxu0 0.0
        %921 = vmatpush.msra.mxu0 %v731
        %922 = vmatmul.f32.gmra.mxu0 %v904
        %v923 = vpop.f32.mrf.mxu0
        %v924 = vadd.f32 0.0, %v923
        %925 = vdwg.mxu0
        %v927 = vsel %vm739, %v865, 0
        %929 = vmatpush.msra.mxu0 0.0
        %930 = vmatpush.msra.mxu0 0.0
        %931 = vmatpush.msra.mxu0 0.0
        %932 = vmatpush.msra.mxu0 0.0
        %933 = vmatpush.msra.mxu0 0.0
        %934 = vmatpush.msra.mxu0 0.0
        %935 = vmatpush.msra.mxu0 0.0
        %936 = vmatpush.msra.mxu0 0.0
        %937 = vmatpush.msra.mxu0 0.0
        %938 = vmatpush.msra.mxu0 0.0
        %939 = vmatpush.msra.mxu0 0.0
        %940 = vmatpush.msra.mxu0 0.0
        %941 = vmatpush.msra.mxu0 0.0
        %942 = vmatpush.msra.mxu0 0.0
        %943 = vmatpush.msra.mxu0 0.0
        %944 = vmatpush.msra.mxu0 %v734
        %945 = vmatmul.f32.gmra.mxu0 %v927
        %v946 = vpop.f32.mrf.mxu0
        %v947 = vadd.f32 0.0, %v946
        %948 = vdwg.mxu0
        %v950 = vsel %vm739, %v867, 0
        %952 = vmatpush.msra.mxu0 0.0
        %953 = vmatpush.msra.mxu0 0.0
        %954 = vmatpush.msra.mxu0 0.0
        %955 = vmatpush.msra.mxu0 0.0
        %956 = vmatpush.msra.mxu0 0.0
        %957 = vmatpush.msra.mxu0 0.0
        %958 = vmatpush.msra.mxu0 0.0
        %959 = vmatpush.msra.mxu0 0.0
        %960 = vmatpush.msra.mxu0 0.0
        %961 = vmatpush.msra.mxu0 0.0
        %962 = vmatpush.msra.mxu0 0.0
        %963 = vmatpush.msra.mxu0 0.0
        %964 = vmatpush.msra.mxu0 0.0
        %965 = vmatpush.msra.mxu0 0.0
        %966 = vmatpush.msra.mxu0 0.0
        %967 = vmatpush.msra.mxu0 %v737
        %968 = vmatmul.f32.gmra.mxu0 %v950
        %v969 = vpop.f32.mrf.mxu0
        %v970 = vadd.f32 0.0, %v969
        %971 = vdwg.mxu0
        %v972 = vrcp.pop %v870
        %v973 = vmul.f32 %v870, %v972
        %v974 = vsub.f32 1.0, %v973
        %v975 = vmul.f32 %v972, %v974
        %v976 = vadd.f32 %v972, %v975
        %vm977 = vweird.f32 %v870
        %vm978 = vweird.f32 %v972
        %vm979 = vmor %vm977, %vm978
        %v980 = vsel %vm979, %v972, %v976
        %v981 = vand.u32 2147483647, %v870
        %vm982 = vcmp.eq.f32.partialorder %v981, 8.507059e+37
        %v983 = vand.u32 %v870, 2147483648
        %v984 = vor.u32 1.1754944e-38, %v983
        %v985 = vsel %vm982, %v984, %v980
        %v986 = vrcp.pop %v873
        %v987 = vmul.f32 %v873, %v986
        %v988 = vsub.f32 1.0, %v987
        %v989 = vmul.f32 %v986, %v988
        %v990 = vadd.f32 %v986, %v989
        %vm991 = vweird.f32 %v873
        %vm992 = vweird.f32 %v986
        %vm993 = vmor %vm991, %vm992
        %v994 = vsel %vm993, %v986, %v990
        %v995 = vand.u32 2147483647, %v873
        %vm996 = vcmp.eq.f32.partialorder %v995, 8.507059e+37
        %v997 = vand.u32 %v873, 2147483648
        %v998 = vor.u32 1.1754944e-38, %v997
        %v999 = vsel %vm996, %v998, %v994
        %v1000 = vrcp.pop %v876
        %v1001 = vmul.f32 %v876, %v1000
        %v1002 = vsub.f32 1.0, %v1001
        %v1003 = vmul.f32 %v1000, %v1002
        %v1004 = vadd.f32 %v1000, %v1003
        %vm1005 = vweird.f32 %v876
        %vm1006 = vweird.f32 %v1000
        %vm1007 = vmor %vm1005, %vm1006
        %v1008 = vsel %vm1007, %v1000, %v1004
        %v1009 = vand.u32 2147483647, %v876
        %vm1010 = vcmp.eq.f32.partialorder %v1009, 8.507059e+37
        %v1011 = vand.u32 %v876, 2147483648
        %v1012 = vor.u32 1.1754944e-38, %v1011
        %v1013 = vsel %vm1010, %v1012, %v1008
        %v1014 = vrcp.pop %v879
        %v1015 = vmul.f32 %v879, %v1014
        %v1016 = vsub.f32 1.0, %v1015
        %v1017 = vmul.f32 %v1014, %v1016
        %v1018 = vadd.f32 %v1014, %v1017
        %vm1019 = vweird.f32 %v879
        %vm1020 = vweird.f32 %v1014
        %vm1021 = vmor %vm1019, %vm1020
        %v1022 = vsel %vm1021, %v1014, %v1018
        %v1023 = vand.u32 2147483647, %v879
        %vm1024 = vcmp.eq.f32.partialorder %v1023, 8.507059e+37
        %v1025 = vand.u32 %v879, 2147483648
        %v1026 = vor.u32 1.1754944e-38, %v1025
        %v1027 = vsel %vm1024, %v1026, %v1022
        %v1028 = vmul.f32 %v901, %v985
        %v1029 = vmul.f32 %v924, %v999
        %v1030 = vmul.f32 %v947, %v1013
        %v1031 = vmul.f32 %v970, %v1027
        %v1032 = vsel %vm739, %v1028, 0.0
        %v1033 = vrot.slane %v1032, 4
        %v1034 = vadd.f32 %v1032, %v1033
        %v1035 = vrot.slane %v1034, 2
        %v1036 = vadd.f32 %v1034, %v1035
        %v1037 = vrot.slane %v1036, 1
        %v1038 = vadd.f32 %v1036, %v1037
        %v1039 = vsel %vm739, %v1029, 0.0
        %v1040 = vrot.slane %v1039, 4
        %v1041 = vadd.f32 %v1039, %v1040
        %v1042 = vrot.slane %v1041, 2
        %v1043 = vadd.f32 %v1041, %v1042
        %v1044 = vrot.slane %v1043, 1
        %v1045 = vadd.f32 %v1043, %v1044
        %v1046 = vsel %vm739, %v1030, 0.0
        %v1047 = vrot.slane %v1046, 4
        %v1048 = vadd.f32 %v1046, %v1047
        %v1049 = vrot.slane %v1048, 2
        %v1050 = vadd.f32 %v1048, %v1049
        %v1051 = vrot.slane %v1050, 1
        %v1052 = vadd.f32 %v1050, %v1051
        %v1053 = vsel %vm739, %v1031, 0.0
        %v1054 = vrot.slane %v1053, 4
        %v1055 = vadd.f32 %v1053, %v1054
        %v1056 = vrot.slane %v1055, 2
        %v1057 = vadd.f32 %v1055, %v1056
        %v1058 = vrot.slane %v1057, 1
        %v1059 = vadd.f32 %v1057, %v1058
        %v1060 = vrcp.pop 8.0
        %v1061 = vmul.f32 8.0, %v1060
        %v1062 = vsub.f32 1.0, %v1061
        %v1063 = vmul.f32 %v1060, %v1062
        %v1064 = vadd.f32 %v1060, %v1063
        %vm1065 = vweird.f32 %v1060
        %v1066 = vsel %vm1065, %v1060, %v1064
        %v1067 = vmul.f32 %v1038, %v1066
        %v1068 = vmul.f32 %v1045, %v1066
        %v1069 = vmul.f32 %v1052, %v1066
        %v1070 = vmul.f32 %v1059, %v1066
        %v1071 = vld [vmem:[#allocation11] sm:$0xff]
        %1072 = vrot.lane.b32.xlu0 %v654, 120
        %v1073 = vpop.permute.xlu0 %1072
        %1074 = vrot.lane.b32.xlu0 %v691, 120
        %v1075 = vpop.permute.xlu0 %1074
        %v1076 = vsel %vm739, %v1073, 0
        %v1078 = vsel %vm739, %v1075, 0
        %1080 = vmatpush.xpose.msra.mxu0 0.0
        %1081 = vmatpush.xpose.msra.mxu0 0.0
        %1082 = vmatpush.xpose.msra.mxu0 0.0
        %1083 = vmatpush.xpose.msra.mxu0 0.0
        %1084 = vmatpush.xpose.msra.mxu0 0.0
        %1085 = vmatpush.xpose.msra.mxu0 0.0
        %1086 = vmatpush.xpose.msra.mxu0 0.0
        %1087 = vmatpush.xpose.msra.mxu0 0.0
        %1088 = vmatpush.xpose.msra.mxu0 0.0
        %1089 = vmatpush.xpose.msra.mxu0 0.0
        %1090 = vmatpush.xpose.msra.mxu0 0.0
        %1091 = vmatpush.xpose.msra.mxu0 0.0
        %1092 = vmatpush.xpose.msra.mxu0 0.0
        %1093 = vmatpush.xpose.msra.mxu0 0.0
        %1094 = vmatpush.xpose.msra.mxu0 0.0
        %1095 = vmatpush.xpose.msra.mxu0 %v1078
        %1096 = vmatmul.f32.gmra.mxu0 %v1076
        %v1097 = vpop.f32.mrf.mxu0
        %v1098 = vadd.f32 0.0, %v1097
        %1099 = vdwg.mxu0
        %1100 = vrot.lane.b32.xlu0 %v657, 120
        %v1101 = vpop.permute.xlu0 %1100
        %1102 = vrot.lane.b32.xlu0 %v694, 120
        %v1103 = vpop.permute.xlu0 %1102
        %v1104 = vsel %vm739, %v1101, 0
        %v1106 = vsel %vm739, %v1103, 0
        %1108 = vmatpush.xpose.msra.mxu0 0.0
        %1109 = vmatpush.xpose.msra.mxu0 0.0
        %1110 = vmatpush.xpose.msra.mxu0 0.0
        %1111 = vmatpush.xpose.msra.mxu0 0.0
        %1112 = vmatpush.xpose.msra.mxu0 0.0
        %1113 = vmatpush.xpose.msra.mxu0 0.0
        %1114 = vmatpush.xpose.msra.mxu0 0.0
        %1115 = vmatpush.xpose.msra.mxu0 0.0
        %1116 = vmatpush.xpose.msra.mxu0 0.0
        %1117 = vmatpush.xpose.msra.mxu0 0.0
        %1118 = vmatpush.xpose.msra.mxu0 0.0
        %1119 = vmatpush.xpose.msra.mxu0 0.0
        %1120 = vmatpush.xpose.msra.mxu0 0.0
        %1121 = vmatpush.xpose.msra.mxu0 0.0
        %1122 = vmatpush.xpose.msra.mxu0 0.0
        %1123 = vmatpush.xpose.msra.mxu0 %v1106
        %1124 = vmatmul.f32.gmra.mxu0 %v1104
        %v1125 = vpop.f32.mrf.mxu0
        %v1126 = vadd.f32 0.0, %v1125
        %1127 = vdwg.mxu0
        %1128 = vrot.lane.b32.xlu0 %v660, 120
        %v1129 = vpop.permute.xlu0 %1128
        %1130 = vrot.lane.b32.xlu0 %v697, 120
        %v1131 = vpop.permute.xlu0 %1130
        %v1132 = vsel %vm739, %v1129, 0
        %v1134 = vsel %vm739, %v1131, 0
        %1136 = vmatpush.xpose.msra.mxu0 0.0
        %1137 = vmatpush.xpose.msra.mxu0 0.0
        %1138 = vmatpush.xpose.msra.mxu0 0.0
        %1139 = vmatpush.xpose.msra.mxu0 0.0
        %1140 = vmatpush.xpose.msra.mxu0 0.0
        %1141 = vmatpush.xpose.msra.mxu0 0.0
        %1142 = vmatpush.xpose.msra.mxu0 0.0
        %1143 = vmatpush.xpose.msra.mxu0 0.0
        %1144 = vmatpush.xpose.msra.mxu0 0.0
        %1145 = vmatpush.xpose.msra.mxu0 0.0
        %1146 = vmatpush.xpose.msra.mxu0 0.0
        %1147 = vmatpush.xpose.msra.mxu0 0.0
        %1148 = vmatpush.xpose.msra.mxu0 0.0
        %1149 = vmatpush.xpose.msra.mxu0 0.0
        %1150 = vmatpush.xpose.msra.mxu0 0.0
        %1151 = vmatpush.xpose.msra.mxu0 %v1134
        %1152 = vmatmul.f32.gmra.mxu0 %v1132
        %v1153 = vpop.f32.mrf.mxu0
        %v1154 = vadd.f32 0.0, %v1153
        %1155 = vdwg.mxu0
        %1156 = vrot.lane.b32.xlu0 %v663, 120
        %v1157 = vpop.permute.xlu0 %1156
        %1158 = vrot.lane.b32.xlu0 %v700, 120
        %v1159 = vpop.permute.xlu0 %1158
        %v1160 = vsel %vm739, %v1157, 0
        %v1162 = vsel %vm739, %v1159, 0
        %1164 = vmatpush.xpose.msra.mxu0 0.0
        %1165 = vmatpush.xpose.msra.mxu0 0.0
        %1166 = vmatpush.xpose.msra.mxu0 0.0
        %1167 = vmatpush.xpose.msra.mxu0 0.0
        %1168 = vmatpush.xpose.msra.mxu0 0.0
        %1169 = vmatpush.xpose.msra.mxu0 0.0
        %1170 = vmatpush.xpose.msra.mxu0 0.0
        %1171 = vmatpush.xpose.msra.mxu0 0.0
        %1172 = vmatpush.xpose.msra.mxu0 0.0
        %1173 = vmatpush.xpose.msra.mxu0 0.0
        %1174 = vmatpush.xpose.msra.mxu0 0.0
        %1175 = vmatpush.xpose.msra.mxu0 0.0
        %1176 = vmatpush.xpose.msra.mxu0 0.0
        %1177 = vmatpush.xpose.msra.mxu0 0.0
        %1178 = vmatpush.xpose.msra.mxu0 0.0
        %1179 = vmatpush.xpose.msra.mxu0 %v1162
        %1180 = vmatmul.f32.gmra.mxu0 %v1160
        %v1181 = vpop.f32.mrf.mxu0
        %v1182 = vadd.f32 0.0, %v1181
        %1183 = vdwg.mxu0
        %v1184 = vsel %vm739, %v1098, -inf
        %1185 = vmax.xlane.f32.xlu0 %v1184
        %v1186 = vpop.xlane.xlu0 %1185
        %v1187 = vsel %vm739, %v1126, -inf
        %1188 = vmax.xlane.f32.xlu0 %v1187
        %v1189 = vpop.xlane.xlu0 %1188
        %v1190 = vsel %vm739, %v1154, -inf
        %1191 = vmax.xlane.f32.xlu0 %v1190
        %v1192 = vpop.xlane.xlu0 %1191
        %v1193 = vsel %vm739, %v1182, -inf
        %1194 = vmax.xlane.f32.xlu0 %v1193
        %v1195 = vpop.xlane.xlu0 %1194
        %v1196 = vsub.f32 %v1098, %v1186
        %v1197 = vsub.f32 %v1126, %v1189
        %v1198 = vsub.f32 %v1154, %v1192
        %v1199 = vsub.f32 %v1182, %v1195
        %v1200 = vmul.f32 %v1196, 1.442695
        %v1201 = vpow.pop %v1200
        %v1202 = vmul.f32 %v1197, 1.442695
        %v1203 = vpow.pop %v1202
        %v1204 = vmul.f32 %v1198, 1.442695
        %v1205 = vpow.pop %v1204
        %v1206 = vmul.f32 %v1199, 1.442695
        %v1207 = vpow.pop %v1206
        %v1208 = vsel %vm739, %v1201, 0.0
        %1209 = vadd.xlane.f32.xlu0 %v1208
        %v1210 = vpop.xlane.xlu0 %1209
        %v1211 = vsel %vm739, %v1203, 0.0
        %1212 = vadd.xlane.f32.xlu0 %v1211
        %v1213 = vpop.xlane.xlu0 %1212
        %v1214 = vsel %vm739, %v1205, 0.0
        %1215 = vadd.xlane.f32.xlu0 %v1214
        %v1216 = vpop.xlane.xlu0 %1215
        %v1217 = vsel %vm739, %v1207, 0.0
        %1218 = vadd.xlane.f32.xlu0 %v1217
        %v1219 = vpop.xlane.xlu0 %1218
        %1221 = vrot.lane.b32.xlu0 %v728, 120
        %v1222 = vpop.permute.xlu0 %1221
        %v1225 = vsel %vm739, %v1201, 0
        %1227 = vmatpush.msra.mxu0 0.0
        %1228 = vmatpush.msra.mxu0 0.0
        %1229 = vmatpush.msra.mxu0 0.0
        %1230 = vmatpush.msra.mxu0 0.0
        %1231 = vmatpush.msra.mxu0 0.0
        %1232 = vmatpush.msra.mxu0 0.0
        %1233 = vmatpush.msra.mxu0 0.0
        %1234 = vmatpush.msra.mxu0 0.0
        %1235 = vmatpush.msra.mxu0 0.0
        %1236 = vmatpush.msra.mxu0 0.0
        %1237 = vmatpush.msra.mxu0 0.0
        %1238 = vmatpush.msra.mxu0 0.0
        %1239 = vmatpush.msra.mxu0 0.0
        %1240 = vmatpush.msra.mxu0 0.0
        %1241 = vmatpush.msra.mxu0 0.0
        %1242 = vmatpush.msra.mxu0 %v1222
        %1243 = vmatmul.f32.gmra.mxu0 %v1225
        %v1244 = vpop.f32.mrf.mxu0
        %v1245 = vadd.f32 0.0, %v1244
        %1246 = vdwg.mxu0
        %1248 = vrot.lane.b32.xlu0 %v731, 120
        %v1249 = vpop.permute.xlu0 %1248
        %v1252 = vsel %vm739, %v1203, 0
        %1254 = vmatpush.msra.mxu0 0.0
        %1255 = vmatpush.msra.mxu0 0.0
        %1256 = vmatpush.msra.mxu0 0.0
        %1257 = vmatpush.msra.mxu0 0.0
        %1258 = vmatpush.msra.mxu0 0.0
        %1259 = vmatpush.msra.mxu0 0.0
        %1260 = vmatpush.msra.mxu0 0.0
        %1261 = vmatpush.msra.mxu0 0.0
        %1262 = vmatpush.msra.mxu0 0.0
        %1263 = vmatpush.msra.mxu0 0.0
        %1264 = vmatpush.msra.mxu0 0.0
        %1265 = vmatpush.msra.mxu0 0.0
        %1266 = vmatpush.msra.mxu0 0.0
        %1267 = vmatpush.msra.mxu0 0.0
        %1268 = vmatpush.msra.mxu0 0.0
        %1269 = vmatpush.msra.mxu0 %v1249
        %1270 = vmatmul.f32.gmra.mxu0 %v1252
        %v1271 = vpop.f32.mrf.mxu0
        %v1272 = vadd.f32 0.0, %v1271
        %1273 = vdwg.mxu0
        %1275 = vrot.lane.b32.xlu0 %v734, 120
        %v1276 = vpop.permute.xlu0 %1275
        %v1279 = vsel %vm739, %v1205, 0
        %1281 = vmatpush.msra.mxu0 0.0
        %1282 = vmatpush.msra.mxu0 0.0
        %1283 = vmatpush.msra.mxu0 0.0
        %1284 = vmatpush.msra.mxu0 0.0
        %1285 = vmatpush.msra.mxu0 0.0
        %1286 = vmatpush.msra.mxu0 0.0
        %1287 = vmatpush.msra.mxu0 0.0
        %1288 = vmatpush.msra.mxu0 0.0
        %1289 = vmatpush.msra.mxu0 0.0
        %1290 = vmatpush.msra.mxu0 0.0
        %1291 = vmatpush.msra.mxu0 0.0
        %1292 = vmatpush.msra.mxu0 0.0
        %1293 = vmatpush.msra.mxu0 0.0
        %1294 = vmatpush.msra.mxu0 0.0
        %1295 = vmatpush.msra.mxu0 0.0
        %1296 = vmatpush.msra.mxu0 %v1276
        %1297 = vmatmul.f32.gmra.mxu0 %v1279
        %v1298 = vpop.f32.mrf.mxu0
        %v1299 = vadd.f32 0.0, %v1298
        %1300 = vdwg.mxu0
        %1302 = vrot.lane.b32.xlu0 %v737, 120
        %v1303 = vpop.permute.xlu0 %1302
        %v1306 = vsel %vm739, %v1207, 0
        %1308 = vmatpush.msra.mxu0 0.0
        %1309 = vmatpush.msra.mxu0 0.0
        %1310 = vmatpush.msra.mxu0 0.0
        %1311 = vmatpush.msra.mxu0 0.0
        %1312 = vmatpush.msra.mxu0 0.0
        %1313 = vmatpush.msra.mxu0 0.0
        %1314 = vmatpush.msra.mxu0 0.0
        %1315 = vmatpush.msra.mxu0 0.0
        %1316 = vmatpush.msra.mxu0 0.0
        %1317 = vmatpush.msra.mxu0 0.0
        %1318 = vmatpush.msra.mxu0 0.0
        %1319 = vmatpush.msra.mxu0 0.0
        %1320 = vmatpush.msra.mxu0 0.0
        %1321 = vmatpush.msra.mxu0 0.0
        %1322 = vmatpush.msra.mxu0 0.0
        %1323 = vmatpush.msra.mxu0 %v1303
        %1324 = vmatmul.f32.gmra.mxu0 %v1306
        %v1325 = vpop.f32.mrf.mxu0
        %v1326 = vadd.f32 0.0, %v1325
        %1327 = vdwg.mxu0
        %v1328 = vrcp.pop %v1210
        %v1329 = vmul.f32 %v1210, %v1328
        %v1330 = vsub.f32 1.0, %v1329
        %v1331 = vmul.f32 %v1328, %v1330
        %v1332 = vadd.f32 %v1328, %v1331
        %vm1333 = vweird.f32 %v1210
        %vm1334 = vweird.f32 %v1328
        %vm1335 = vmor %vm1333, %vm1334
        %v1336 = vsel %vm1335, %v1328, %v1332
        %v1337 = vand.u32 2147483647, %v1210
        %vm1338 = vcmp.eq.f32.partialorder %v1337, 8.507059e+37
        %v1339 = vand.u32 %v1210, 2147483648
        %v1340 = vor.u32 1.1754944e-38, %v1339
        %v1341 = vsel %vm1338, %v1340, %v1336
        %v1342 = vrcp.pop %v1213
        %v1343 = vmul.f32 %v1213, %v1342
        %v1344 = vsub.f32 1.0, %v1343
        %v1345 = vmul.f32 %v1342, %v1344
        %v1346 = vadd.f32 %v1342, %v1345
        %vm1347 = vweird.f32 %v1213
        %vm1348 = vweird.f32 %v1342
        %vm1349 = vmor %vm1347, %vm1348
        %v1350 = vsel %vm1349, %v1342, %v1346
        %v1351 = vand.u32 2147483647, %v1213
        %vm1352 = vcmp.eq.f32.partialorder %v1351, 8.507059e+37
        %v1353 = vand.u32 %v1213, 2147483648
        %v1354 = vor.u32 1.1754944e-38, %v1353
        %v1355 = vsel %vm1352, %v1354, %v1350
        %v1356 = vrcp.pop %v1216
        %v1357 = vmul.f32 %v1216, %v1356
        %v1358 = vsub.f32 1.0, %v1357
        %v1359 = vmul.f32 %v1356, %v1358
        %v1360 = vadd.f32 %v1356, %v1359
        %vm1361 = vweird.f32 %v1216
        %vm1362 = vweird.f32 %v1356
        %vm1363 = vmor %vm1361, %vm1362
        %v1364 = vsel %vm1363, %v1356, %v1360
        %v1365 = vand.u32 2147483647, %v1216
        %vm1366 = vcmp.eq.f32.partialorder %v1365, 8.507059e+37
        %v1367 = vand.u32 %v1216, 2147483648
        %v1368 = vor.u32 1.1754944e-38, %v1367
        %v1369 = vsel %vm1366, %v1368, %v1364
        %v1370 = vrcp.pop %v1219
        %v1371 = vmul.f32 %v1219, %v1370
        %v1372 = vsub.f32 1.0, %v1371
        %v1373 = vmul.f32 %v1370, %v1372
        %v1374 = vadd.f32 %v1370, %v1373
        %vm1375 = vweird.f32 %v1219
        %vm1376 = vweird.f32 %v1370
        %vm1377 = vmor %vm1375, %vm1376
        %v1378 = vsel %vm1377, %v1370, %v1374
        %v1379 = vand.u32 2147483647, %v1219
        %vm1380 = vcmp.eq.f32.partialorder %v1379, 8.507059e+37
        %v1381 = vand.u32 %v1219, 2147483648
        %v1382 = vor.u32 1.1754944e-38, %v1381
        %v1383 = vsel %vm1380, %v1382, %v1378
        %v1384 = vmul.f32 %v1245, %v1341
        %v1385 = vmul.f32 %v1272, %v1355
        %v1386 = vmul.f32 %v1299, %v1369
        %v1387 = vmul.f32 %v1326, %v1383
        %v1388 = vsel %vm739, %v1384, 0.0
        %v1389 = vrot.slane %v1388, 4
        %v1390 = vadd.f32 %v1388, %v1389
        %v1391 = vrot.slane %v1390, 2
        %v1392 = vadd.f32 %v1390, %v1391
        %v1393 = vrot.slane %v1392, 1
        %v1394 = vadd.f32 %v1392, %v1393
        %v1395 = vsel %vm739, %v1385, 0.0
        %v1396 = vrot.slane %v1395, 4
        %v1397 = vadd.f32 %v1395, %v1396
        %v1398 = vrot.slane %v1397, 2
        %v1399 = vadd.f32 %v1397, %v1398
        %v1400 = vrot.slane %v1399, 1
        %v1401 = vadd.f32 %v1399, %v1400
        %v1402 = vsel %vm739, %v1386, 0.0
        %v1403 = vrot.slane %v1402, 4
        %v1404 = vadd.f32 %v1402, %v1403
        %v1405 = vrot.slane %v1404, 2
        %v1406 = vadd.f32 %v1404, %v1405
        %v1407 = vrot.slane %v1406, 1
        %v1408 = vadd.f32 %v1406, %v1407
        %v1409 = vsel %vm739, %v1387, 0.0
        %v1410 = vrot.slane %v1409, 4
        %v1411 = vadd.f32 %v1409, %v1410
        %v1412 = vrot.slane %v1411, 2
        %v1413 = vadd.f32 %v1411, %v1412
        %v1414 = vrot.slane %v1413, 1
        %v1415 = vadd.f32 %v1413, %v1414
        %v1416 = vmul.f32 %v1394, %v1066
        %v1417 = vmul.f32 %v1401, %v1066
        %v1418 = vmul.f32 %v1408, %v1066
        %v1419 = vmul.f32 %v1415, %v1066
        %v1420 = vld [vmem:[#allocation11 + $0x8] sm:$0xff]
        %vm1425 = vcmask 1041409
        %v1426 = vsel %vm1425, %v1417, %v1416
        %vm1427 = vcmask 1042434
        %v1428 = vsel %vm1427, %v1418, %v1426
        %vm1429 = vcmask 1043459
        %v1430 = vsel %vm1429, %v1419, %v1428
        %v1431 = vsel %vm739, %v1430, 0
        %1433 = vmatpush.msra.mxu0 0.0
        %1434 = vmatpush.msra.mxu0 0.0
        %1435 = vmatpush.msra.mxu0 0.0
        %1436 = vmatpush.msra.mxu0 0.0
        %1437 = vmatpush.msra.mxu0 0.0
        %1438 = vmatpush.msra.mxu0 0.0
        %1439 = vmatpush.msra.mxu0 0.0
        %1440 = vmatpush.msra.mxu0 0.0
        %1441 = vmatpush.msra.mxu0 0.0
        %1442 = vmatpush.msra.mxu0 0.0
        %1443 = vmatpush.msra.mxu0 0.0
        %1444 = vmatpush.msra.mxu0 0.0
        %1445 = vmatpush.msra.mxu0 0.0
        %1446 = vmatpush.msra.mxu0 0.0
        %1447 = vmatpush.msra.mxu0 0.0
        %1448 = vmatpush.msra.mxu0 %v1420
        %1449 = vmatmul.f32.gmra.mxu0 %v1431
        %v1450 = vpop.f32.mrf.mxu0
        %v1451 = vadd.f32 0.0, %v1450
        %1452 = vdwg.mxu0
        %v1457 = vsel %vm1425, %v1068, %v1067
        %v1458 = vsel %vm1427, %v1069, %v1457
        %v1459 = vsel %vm1429, %v1070, %v1458
        %v1460 = vsel %vm739, %v1459, 0
        %1462 = vmatpush.msra.mxu0 0.0
        %1463 = vmatpush.msra.mxu0 0.0
        %1464 = vmatpush.msra.mxu0 0.0
        %1465 = vmatpush.msra.mxu0 0.0
        %1466 = vmatpush.msra.mxu0 0.0
        %1467 = vmatpush.msra.mxu0 0.0
        %1468 = vmatpush.msra.mxu0 0.0
        %1469 = vmatpush.msra.mxu0 0.0
        %1470 = vmatpush.msra.mxu0 0.0
        %1471 = vmatpush.msra.mxu0 0.0
        %1472 = vmatpush.msra.mxu0 0.0
        %1473 = vmatpush.msra.mxu0 0.0
        %1474 = vmatpush.msra.mxu0 0.0
        %1475 = vmatpush.msra.mxu0 0.0
        %1476 = vmatpush.msra.mxu0 0.0
        %1477 = vmatpush.msra.mxu0 %v1071
        %1478 = vmatmul.f32.gmra.mxu0 %v1460
        %v1479 = vpop.f32.mrf.mxu0
        %v1480 = vadd.f32 %v1451, %v1479
        %1481 = vdwg.mxu0
        %1482 = vrot.lane.b32.xlu0 %v654, 112
        %v1483 = vpop.permute.xlu0 %1482
        %1484 = vrot.lane.b32.xlu0 %v691, 112
        %v1485 = vpop.permute.xlu0 %1484
        %v1486 = vsel %vm739, %v1483, 0
        %v1488 = vsel %vm739, %v1485, 0
        %1490 = vmatpush.xpose.msra.mxu0 0.0
        %1491 = vmatpush.xpose.msra.mxu0 0.0
        %1492 = vmatpush.xpose.msra.mxu0 0.0
        %1493 = vmatpush.xpose.msra.mxu0 0.0
        %1494 = vmatpush.xpose.msra.mxu0 0.0
        %1495 = vmatpush.xpose.msra.mxu0 0.0
        %1496 = vmatpush.xpose.msra.mxu0 0.0
        %1497 = vmatpush.xpose.msra.mxu0 0.0
        %1498 = vmatpush.xpose.msra.mxu0 0.0
        %1499 = vmatpush.xpose.msra.mxu0 0.0
        %1500 = vmatpush.xpose.msra.mxu0 0.0
        %1501 = vmatpush.xpose.msra.mxu0 0.0
        %1502 = vmatpush.xpose.msra.mxu0 0.0
        %1503 = vmatpush.xpose.msra.mxu0 0.0
        %1504 = vmatpush.xpose.msra.mxu0 0.0
        %1505 = vmatpush.xpose.msra.mxu0 %v1488
        %1506 = vmatmul.f32.gmra.mxu0 %v1486
        %v1507 = vpop.f32.mrf.mxu0
        %v1508 = vadd.f32 0.0, %v1507
        %1509 = vdwg.mxu0
        %1510 = vrot.lane.b32.xlu0 %v657, 112
        %v1511 = vpop.permute.xlu0 %1510
        %1512 = vrot.lane.b32.xlu0 %v694, 112
        %v1513 = vpop.permute.xlu0 %1512
        %v1514 = vsel %vm739, %v1511, 0
        %v1516 = vsel %vm739, %v1513, 0
        %1518 = vmatpush.xpose.msra.mxu0 0.0
        %1519 = vmatpush.xpose.msra.mxu0 0.0
        %1520 = vmatpush.xpose.msra.mxu0 0.0
        %1521 = vmatpush.xpose.msra.mxu0 0.0
        %1522 = vmatpush.xpose.msra.mxu0 0.0
        %1523 = vmatpush.xpose.msra.mxu0 0.0
        %1524 = vmatpush.xpose.msra.mxu0 0.0
        %1525 = vmatpush.xpose.msra.mxu0 0.0
        %1526 = vmatpush.xpose.msra.mxu0 0.0
        %1527 = vmatpush.xpose.msra.mxu0 0.0
        %1528 = vmatpush.xpose.msra.mxu0 0.0
        %1529 = vmatpush.xpose.msra.mxu0 0.0
        %1530 = vmatpush.xpose.msra.mxu0 0.0
        %1531 = vmatpush.xpose.msra.mxu0 0.0
        %1532 = vmatpush.xpose.msra.mxu0 0.0
        %1533 = vmatpush.xpose.msra.mxu0 %v1516
        %1534 = vmatmul.f32.gmra.mxu0 %v1514
        %v1535 = vpop.f32.mrf.mxu0
        %v1536 = vadd.f32 0.0, %v1535
        %1537 = vdwg.mxu0
        %1538 = vrot.lane.b32.xlu0 %v660, 112
        %v1539 = vpop.permute.xlu0 %1538
        %1540 = vrot.lane.b32.xlu0 %v697, 112
        %v1541 = vpop.permute.xlu0 %1540
        %v1542 = vsel %vm739, %v1539, 0
        %v1544 = vsel %vm739, %v1541, 0
        %1546 = vmatpush.xpose.msra.mxu0 0.0
        %1547 = vmatpush.xpose.msra.mxu0 0.0
        %1548 = vmatpush.xpose.msra.mxu0 0.0
        %1549 = vmatpush.xpose.msra.mxu0 0.0
        %1550 = vmatpush.xpose.msra.mxu0 0.0
        %1551 = vmatpush.xpose.msra.mxu0 0.0
        %1552 = vmatpush.xpose.msra.mxu0 0.0
        %1553 = vmatpush.xpose.msra.mxu0 0.0
        %1554 = vmatpush.xpose.msra.mxu0 0.0
        %1555 = vmatpush.xpose.msra.mxu0 0.0
        %1556 = vmatpush.xpose.msra.mxu0 0.0
        %1557 = vmatpush.xpose.msra.mxu0 0.0
        %1558 = vmatpush.xpose.msra.mxu0 0.0
        %1559 = vmatpush.xpose.msra.mxu0 0.0
        %1560 = vmatpush.xpose.msra.mxu0 0.0
        %1561 = vmatpush.xpose.msra.mxu0 %v1544
        %1562 = vmatmul.f32.gmra.mxu0 %v1542
        %v1563 = vpop.f32.mrf.mxu0
        %v1564 = vadd.f32 0.0, %v1563
        %1565 = vdwg.mxu0
        %1566 = vrot.lane.b32.xlu0 %v663, 112
        %v1567 = vpop.permute.xlu0 %1566
        %1568 = vrot.lane.b32.xlu0 %v700, 112
        %v1569 = vpop.permute.xlu0 %1568
        %v1570 = vsel %vm739, %v1567, 0
        %v1572 = vsel %vm739, %v1569, 0
        %1574 = vmatpush.xpose.msra.mxu0 0.0
        %1575 = vmatpush.xpose.msra.mxu0 0.0
        %1576 = vmatpush.xpose.msra.mxu0 0.0
        %1577 = vmatpush.xpose.msra.mxu0 0.0
        %1578 = vmatpush.xpose.msra.mxu0 0.0
        %1579 = vmatpush.xpose.msra.mxu0 0.0
        %1580 = vmatpush.xpose.msra.mxu0 0.0
        %1581 = vmatpush.xpose.msra.mxu0 0.0
        %1582 = vmatpush.xpose.msra.mxu0 0.0
        %1583 = vmatpush.xpose.msra.mxu0 0.0
        %1584 = vmatpush.xpose.msra.mxu0 0.0
        %1585 = vmatpush.xpose.msra.mxu0 0.0
        %1586 = vmatpush.xpose.msra.mxu0 0.0
        %1587 = vmatpush.xpose.msra.mxu0 0.0
        %1588 = vmatpush.xpose.msra.mxu0 0.0
        %1589 = vmatpush.xpose.msra.mxu0 %v1572
        %1590 = vmatmul.f32.gmra.mxu0 %v1570
        %v1591 = vpop.f32.mrf.mxu0
        %v1592 = vadd.f32 0.0, %v1591
        %1593 = vdwg.mxu0
        %v1594 = vsel %vm739, %v1508, -inf
        %1595 = vmax.xlane.f32.xlu0 %v1594
        %v1596 = vpop.xlane.xlu0 %1595
        %v1597 = vsel %vm739, %v1536, -inf
        %1598 = vmax.xlane.f32.xlu0 %v1597
        %v1599 = vpop.xlane.xlu0 %1598
        %v1600 = vsel %vm739, %v1564, -inf
        %1601 = vmax.xlane.f32.xlu0 %v1600
        %v1602 = vpop.xlane.xlu0 %1601
        %v1603 = vsel %vm739, %v1592, -inf
        %1604 = vmax.xlane.f32.xlu0 %v1603
        %v1605 = vpop.xlane.xlu0 %1604
        %v1606 = vsub.f32 %v1508, %v1596
        %v1607 = vsub.f32 %v1536, %v1599
        %v1608 = vsub.f32 %v1564, %v1602
        %v1609 = vsub.f32 %v1592, %v1605
        %v1610 = vmul.f32 %v1606, 1.442695
        %v1611 = vpow.pop %v1610
        %v1612 = vmul.f32 %v1607, 1.442695
        %v1613 = vpow.pop %v1612
        %v1614 = vmul.f32 %v1608, 1.442695
        %v1615 = vpow.pop %v1614
        %v1616 = vmul.f32 %v1609, 1.442695
        %v1617 = vpow.pop %v1616
        %v1618 = vsel %vm739, %v1611, 0.0
        %1619 = vadd.xlane.f32.xlu0 %v1618
        %v1620 = vpop.xlane.xlu0 %1619
        %v1621 = vsel %vm739, %v1613, 0.0
        %1622 = vadd.xlane.f32.xlu0 %v1621
        %v1623 = vpop.xlane.xlu0 %1622
        %v1624 = vsel %vm739, %v1615, 0.0
        %1625 = vadd.xlane.f32.xlu0 %v1624
        %v1626 = vpop.xlane.xlu0 %1625
        %v1627 = vsel %vm739, %v1617, 0.0
        %1628 = vadd.xlane.f32.xlu0 %v1627
        %v1629 = vpop.xlane.xlu0 %1628
        %1630 = vrot.lane.b32.xlu0 %v728, 112
        %v1631 = vpop.permute.xlu0 %1630
        %v1634 = vsel %vm739, %v1611, 0
        %1636 = vmatpush.msra.mxu0 0.0
        %1637 = vmatpush.msra.mxu0 0.0
        %1638 = vmatpush.msra.mxu0 0.0
        %1639 = vmatpush.msra.mxu0 0.0
        %1640 = vmatpush.msra.mxu0 0.0
        %1641 = vmatpush.msra.mxu0 0.0
        %1642 = vmatpush.msra.mxu0 0.0
        %1643 = vmatpush.msra.mxu0 0.0
        %1644 = vmatpush.msra.mxu0 0.0
        %1645 = vmatpush.msra.mxu0 0.0
        %1646 = vmatpush.msra.mxu0 0.0
        %1647 = vmatpush.msra.mxu0 0.0
        %1648 = vmatpush.msra.mxu0 0.0
        %1649 = vmatpush.msra.mxu0 0.0
        %1650 = vmatpush.msra.mxu0 0.0
        %1651 = vmatpush.msra.mxu0 %v1631
        %1652 = vmatmul.f32.gmra.mxu0 %v1634
        %v1653 = vpop.f32.mrf.mxu0
        %v1654 = vadd.f32 0.0, %v1653
        %1655 = vdwg.mxu0
        %1656 = vrot.lane.b32.xlu0 %v731, 112
        %v1657 = vpop.permute.xlu0 %1656
        %v1660 = vsel %vm739, %v1613, 0
        %1662 = vmatpush.msra.mxu0 0.0
        %1663 = vmatpush.msra.mxu0 0.0
        %1664 = vmatpush.msra.mxu0 0.0
        %1665 = vmatpush.msra.mxu0 0.0
        %1666 = vmatpush.msra.mxu0 0.0
        %1667 = vmatpush.msra.mxu0 0.0
        %1668 = vmatpush.msra.mxu0 0.0
        %1669 = vmatpush.msra.mxu0 0.0
        %1670 = vmatpush.msra.mxu0 0.0
        %1671 = vmatpush.msra.mxu0 0.0
        %1672 = vmatpush.msra.mxu0 0.0
        %1673 = vmatpush.msra.mxu0 0.0
        %1674 = vmatpush.msra.mxu0 0.0
        %1675 = vmatpush.msra.mxu0 0.0
        %1676 = vmatpush.msra.mxu0 0.0
        %1677 = vmatpush.msra.mxu0 %v1657
        %1678 = vmatmul.f32.gmra.mxu0 %v1660
        %v1679 = vpop.f32.mrf.mxu0
        %v1680 = vadd.f32 0.0, %v1679
        %1681 = vdwg.mxu0
        %1682 = vrot.lane.b32.xlu0 %v734, 112
        %v1683 = vpop.permute.xlu0 %1682
        %v1686 = vsel %vm739, %v1615, 0
        %1688 = vmatpush.msra.mxu0 0.0
        %1689 = vmatpush.msra.mxu0 0.0
        %1690 = vmatpush.msra.mxu0 0.0
        %1691 = vmatpush.msra.mxu0 0.0
        %1692 = vmatpush.msra.mxu0 0.0
        %1693 = vmatpush.msra.mxu0 0.0
        %1694 = vmatpush.msra.mxu0 0.0
        %1695 = vmatpush.msra.mxu0 0.0
        %1696 = vmatpush.msra.mxu0 0.0
        %1697 = vmatpush.msra.mxu0 0.0
        %1698 = vmatpush.msra.mxu0 0.0
        %1699 = vmatpush.msra.mxu0 0.0
        %1700 = vmatpush.msra.mxu0 0.0
        %1701 = vmatpush.msra.mxu0 0.0
        %1702 = vmatpush.msra.mxu0 0.0
        %1703 = vmatpush.msra.mxu0 %v1683
        %1704 = vmatmul.f32.gmra.mxu0 %v1686
        %v1705 = vpop.f32.mrf.mxu0
        %v1706 = vadd.f32 0.0, %v1705
        %1707 = vdwg.mxu0
        %1708 = vrot.lane.b32.xlu0 %v737, 112
        %v1709 = vpop.permute.xlu0 %1708
        %v1712 = vsel %vm739, %v1617, 0
        %1714 = vmatpush.msra.mxu0 0.0
        %1715 = vmatpush.msra.mxu0 0.0
        %1716 = vmatpush.msra.mxu0 0.0
        %1717 = vmatpush.msra.mxu0 0.0
        %1718 = vmatpush.msra.mxu0 0.0
        %1719 = vmatpush.msra.mxu0 0.0
        %1720 = vmatpush.msra.mxu0 0.0
        %1721 = vmatpush.msra.mxu0 0.0
        %1722 = vmatpush.msra.mxu0 0.0
        %1723 = vmatpush.msra.mxu0 0.0
        %1724 = vmatpush.msra.mxu0 0.0
        %1725 = vmatpush.msra.mxu0 0.0
        %1726 = vmatpush.msra.mxu0 0.0
        %1727 = vmatpush.msra.mxu0 0.0
        %1728 = vmatpush.msra.mxu0 0.0
        %1729 = vmatpush.msra.mxu0 %v1709
        %1730 = vmatmul.f32.gmra.mxu0 %v1712
        %v1731 = vpop.f32.mrf.mxu0
        %v1732 = vadd.f32 0.0, %v1731
        %1733 = vdwg.mxu0
        %v1734 = vrcp.pop %v1620
        %v1735 = vmul.f32 %v1620, %v1734
        %v1736 = vsub.f32 1.0, %v1735
        %v1737 = vmul.f32 %v1734, %v1736
        %v1738 = vadd.f32 %v1734, %v1737
        %vm1739 = vweird.f32 %v1620
        %vm1740 = vweird.f32 %v1734
        %vm1741 = vmor %vm1739, %vm1740
        %v1742 = vsel %vm1741, %v1734, %v1738
        %v1743 = vand.u32 2147483647, %v1620
        %vm1744 = vcmp.eq.f32.partialorder %v1743, 8.507059e+37
        %v1745 = vand.u32 %v1620, 2147483648
        %v1746 = vor.u32 1.1754944e-38, %v1745
        %v1747 = vsel %vm1744, %v1746, %v1742
        %v1748 = vrcp.pop %v1623
        %v1749 = vmul.f32 %v1623, %v1748
        %v1750 = vsub.f32 1.0, %v1749
        %v1751 = vmul.f32 %v1748, %v1750
        %v1752 = vadd.f32 %v1748, %v1751
        %vm1753 = vweird.f32 %v1623
        %vm1754 = vweird.f32 %v1748
        %vm1755 = vmor %vm1753, %vm1754
        %v1756 = vsel %vm1755, %v1748, %v1752
        %v1757 = vand.u32 2147483647, %v1623
        %vm1758 = vcmp.eq.f32.partialorder %v1757, 8.507059e+37
        %v1759 = vand.u32 %v1623, 2147483648
        %v1760 = vor.u32 1.1754944e-38, %v1759
        %v1761 = vsel %vm1758, %v1760, %v1756
        %v1762 = vrcp.pop %v1626
        %v1763 = vmul.f32 %v1626, %v1762
        %v1764 = vsub.f32 1.0, %v1763
        %v1765 = vmul.f32 %v1762, %v1764
        %v1766 = vadd.f32 %v1762, %v1765
        %vm1767 = vweird.f32 %v1626
        %vm1768 = vweird.f32 %v1762
        %vm1769 = vmor %vm1767, %vm1768
        %v1770 = vsel %vm1769, %v1762, %v1766
        %v1771 = vand.u32 2147483647, %v1626
        %vm1772 = vcmp.eq.f32.partialorder %v1771, 8.507059e+37
        %v1773 = vand.u32 %v1626, 2147483648
        %v1774 = vor.u32 1.1754944e-38, %v1773
        %v1775 = vsel %vm1772, %v1774, %v1770
        %v1776 = vrcp.pop %v1629
        %v1777 = vmul.f32 %v1629, %v1776
        %v1778 = vsub.f32 1.0, %v1777
        %v1779 = vmul.f32 %v1776, %v1778
        %v1780 = vadd.f32 %v1776, %v1779
        %vm1781 = vweird.f32 %v1629
        %vm1782 = vweird.f32 %v1776
        %vm1783 = vmor %vm1781, %vm1782
        %v1784 = vsel %vm1783, %v1776, %v1780
        %v1785 = vand.u32 2147483647, %v1629
        %vm1786 = vcmp.eq.f32.partialorder %v1785, 8.507059e+37
        %v1787 = vand.u32 %v1629, 2147483648
        %v1788 = vor.u32 1.1754944e-38, %v1787
        %v1789 = vsel %vm1786, %v1788, %v1784
        %v1790 = vmul.f32 %v1654, %v1747
        %v1791 = vmul.f32 %v1680, %v1761
        %v1792 = vmul.f32 %v1706, %v1775
        %v1793 = vmul.f32 %v1732, %v1789
        %v1794 = vsel %vm739, %v1790, 0.0
        %v1795 = vrot.slane %v1794, 4
        %v1796 = vadd.f32 %v1794, %v1795
        %v1797 = vrot.slane %v1796, 2
        %v1798 = vadd.f32 %v1796, %v1797
        %v1799 = vrot.slane %v1798, 1
        %v1800 = vadd.f32 %v1798, %v1799
        %v1801 = vsel %vm739, %v1791, 0.0
        %v1802 = vrot.slane %v1801, 4
        %v1803 = vadd.f32 %v1801, %v1802
        %v1804 = vrot.slane %v1803, 2
        %v1805 = vadd.f32 %v1803, %v1804
        %v1806 = vrot.slane %v1805, 1
        %v1807 = vadd.f32 %v1805, %v1806
        %v1808 = vsel %vm739, %v1792, 0.0
        %v1809 = vrot.slane %v1808, 4
        %v1810 = vadd.f32 %v1808, %v1809
        %v1811 = vrot.slane %v1810, 2
        %v1812 = vadd.f32 %v1810, %v1811
        %v1813 = vrot.slane %v1812, 1
        %v1814 = vadd.f32 %v1812, %v1813
        %v1815 = vsel %vm739, %v1793, 0.0
        %v1816 = vrot.slane %v1815, 4
        %v1817 = vadd.f32 %v1815, %v1816
        %v1818 = vrot.slane %v1817, 2
        %v1819 = vadd.f32 %v1817, %v1818
        %v1820 = vrot.slane %v1819, 1
        %v1821 = vadd.f32 %v1819, %v1820
        %v1822 = vmul.f32 %v1800, %v1066
        %v1823 = vmul.f32 %v1807, %v1066
        %v1824 = vmul.f32 %v1814, %v1066
        %v1825 = vmul.f32 %v1821, %v1066
        %v1826 = vld [vmem:[#allocation11 + $0x10] sm:$0xff]
        %v1831 = vsel %vm1425, %v1823, %v1822
        %v1832 = vsel %vm1427, %v1824, %v1831
        %v1833 = vsel %vm1429, %v1825, %v1832
        %v1834 = vsel %vm739, %v1833, 0
        %1836 = vmatpush.msra.mxu0 0.0
        %1837 = vmatpush.msra.mxu0 0.0
        %1838 = vmatpush.msra.mxu0 0.0
        %1839 = vmatpush.msra.mxu0 0.0
        %1840 = vmatpush.msra.mxu0 0.0
        %1841 = vmatpush.msra.mxu0 0.0
        %1842 = vmatpush.msra.mxu0 0.0
        %1843 = vmatpush.msra.mxu0 0.0
        %1844 = vmatpush.msra.mxu0 0.0
        %1845 = vmatpush.msra.mxu0 0.0
        %1846 = vmatpush.msra.mxu0 0.0
        %1847 = vmatpush.msra.mxu0 0.0
        %1848 = vmatpush.msra.mxu0 0.0
        %1849 = vmatpush.msra.mxu0 0.0
        %1850 = vmatpush.msra.mxu0 0.0
        %1851 = vmatpush.msra.mxu0 %v1826
        %1852 = vmatmul.f32.gmra.mxu0 %v1834
        %v1853 = vpop.f32.mrf.mxu0
        %v1854 = vadd.f32 0.0, %v1853
        %1855 = vdwg.mxu0
        %v1856 = vadd.f32 %v1480, %v1854
        %1857 = vrot.lane.b32.xlu0 %v654, 104
        %v1858 = vpop.permute.xlu0 %1857
        %1859 = vrot.lane.b32.xlu0 %v691, 104
        %v1860 = vpop.permute.xlu0 %1859
        %v1861 = vsel %vm739, %v1858, 0
        %v1863 = vsel %vm739, %v1860, 0
        %1865 = vmatpush.xpose.msra.mxu0 0.0
        %1866 = vmatpush.xpose.msra.mxu0 0.0
        %1867 = vmatpush.xpose.msra.mxu0 0.0
        %1868 = vmatpush.xpose.msra.mxu0 0.0
        %1869 = vmatpush.xpose.msra.mxu0 0.0
        %1870 = vmatpush.xpose.msra.mxu0 0.0
        %1871 = vmatpush.xpose.msra.mxu0 0.0
        %1872 = vmatpush.xpose.msra.mxu0 0.0
        %1873 = vmatpush.xpose.msra.mxu0 0.0
        %1874 = vmatpush.xpose.msra.mxu0 0.0
        %1875 = vmatpush.xpose.msra.mxu0 0.0
        %1876 = vmatpush.xpose.msra.mxu0 0.0
        %1877 = vmatpush.xpose.msra.mxu0 0.0
        %1878 = vmatpush.xpose.msra.mxu0 0.0
        %1879 = vmatpush.xpose.msra.mxu0 0.0
        %1880 = vmatpush.xpose.msra.mxu0 %v1863
        %1881 = vmatmul.f32.gmra.mxu0 %v1861
        %v1882 = vpop.f32.mrf.mxu0
        %v1883 = vadd.f32 0.0, %v1882
        %1884 = vdwg.mxu0
        %1885 = vrot.lane.b32.xlu0 %v657, 104
        %v1886 = vpop.permute.xlu0 %1885
        %1887 = vrot.lane.b32.xlu0 %v694, 104
        %v1888 = vpop.permute.xlu0 %1887
        %v1889 = vsel %vm739, %v1886, 0
        %v1891 = vsel %vm739, %v1888, 0
        %1893 = vmatpush.xpose.msra.mxu0 0.0
        %1894 = vmatpush.xpose.msra.mxu0 0.0
        %1895 = vmatpush.xpose.msra.mxu0 0.0
        %1896 = vmatpush.xpose.msra.mxu0 0.0
        %1897 = vmatpush.xpose.msra.mxu0 0.0
        %1898 = vmatpush.xpose.msra.mxu0 0.0
        %1899 = vmatpush.xpose.msra.mxu0 0.0
        %1900 = vmatpush.xpose.msra.mxu0 0.0
        %1901 = vmatpush.xpose.msra.mxu0 0.0
        %1902 = vmatpush.xpose.msra.mxu0 0.0
        %1903 = vmatpush.xpose.msra.mxu0 0.0
        %1904 = vmatpush.xpose.msra.mxu0 0.0
        %1905 = vmatpush.xpose.msra.mxu0 0.0
        %1906 = vmatpush.xpose.msra.mxu0 0.0
        %1907 = vmatpush.xpose.msra.mxu0 0.0
        %1908 = vmatpush.xpose.msra.mxu0 %v1891
        %1909 = vmatmul.f32.gmra.mxu0 %v1889
        %v1910 = vpop.f32.mrf.mxu0
        %v1911 = vadd.f32 0.0, %v1910
        %1912 = vdwg.mxu0
        %1913 = vrot.lane.b32.xlu0 %v660, 104
        %v1914 = vpop.permute.xlu0 %1913
        %1915 = vrot.lane.b32.xlu0 %v697, 104
        %v1916 = vpop.permute.xlu0 %1915
        %v1917 = vsel %vm739, %v1914, 0
        %v1919 = vsel %vm739, %v1916, 0
        %1921 = vmatpush.xpose.msra.mxu0 0.0
        %1922 = vmatpush.xpose.msra.mxu0 0.0
        %1923 = vmatpush.xpose.msra.mxu0 0.0
        %1924 = vmatpush.xpose.msra.mxu0 0.0
        %1925 = vmatpush.xpose.msra.mxu0 0.0
        %1926 = vmatpush.xpose.msra.mxu0 0.0
        %1927 = vmatpush.xpose.msra.mxu0 0.0
        %1928 = vmatpush.xpose.msra.mxu0 0.0
        %1929 = vmatpush.xpose.msra.mxu0 0.0
        %1930 = vmatpush.xpose.msra.mxu0 0.0
        %1931 = vmatpush.xpose.msra.mxu0 0.0
        %1932 = vmatpush.xpose.msra.mxu0 0.0
        %1933 = vmatpush.xpose.msra.mxu0 0.0
        %1934 = vmatpush.xpose.msra.mxu0 0.0
        %1935 = vmatpush.xpose.msra.mxu0 0.0
        %1936 = vmatpush.xpose.msra.mxu0 %v1919
        %1937 = vmatmul.f32.gmra.mxu0 %v1917
        %v1938 = vpop.f32.mrf.mxu0
        %v1939 = vadd.f32 0.0, %v1938
        %1940 = vdwg.mxu0
        %1941 = vrot.lane.b32.xlu0 %v663, 104
        %v1942 = vpop.permute.xlu0 %1941
        %1943 = vrot.lane.b32.xlu0 %v700, 104
        %v1944 = vpop.permute.xlu0 %1943
        %v1945 = vsel %vm739, %v1942, 0
        %v1947 = vsel %vm739, %v1944, 0
        %1949 = vmatpush.xpose.msra.mxu0 0.0
        %1950 = vmatpush.xpose.msra.mxu0 0.0
        %1951 = vmatpush.xpose.msra.mxu0 0.0
        %1952 = vmatpush.xpose.msra.mxu0 0.0
        %1953 = vmatpush.xpose.msra.mxu0 0.0
        %1954 = vmatpush.xpose.msra.mxu0 0.0
        %1955 = vmatpush.xpose.msra.mxu0 0.0
        %1956 = vmatpush.xpose.msra.mxu0 0.0
        %1957 = vmatpush.xpose.msra.mxu0 0.0
        %1958 = vmatpush.xpose.msra.mxu0 0.0
        %1959 = vmatpush.xpose.msra.mxu0 0.0
        %1960 = vmatpush.xpose.msra.mxu0 0.0
        %1961 = vmatpush.xpose.msra.mxu0 0.0
        %1962 = vmatpush.xpose.msra.mxu0 0.0
        %1963 = vmatpush.xpose.msra.mxu0 0.0
        %1964 = vmatpush.xpose.msra.mxu0 %v1947
        %1965 = vmatmul.f32.gmra.mxu0 %v1945
        %v1966 = vpop.f32.mrf.mxu0
        %v1967 = vadd.f32 0.0, %v1966
        %1968 = vdwg.mxu0
        %v1969 = vsel %vm739, %v1883, -inf
        %1970 = vmax.xlane.f32.xlu0 %v1969
        %v1971 = vpop.xlane.xlu0 %1970
        %v1972 = vsel %vm739, %v1911, -inf
        %1973 = vmax.xlane.f32.xlu0 %v1972
        %v1974 = vpop.xlane.xlu0 %1973
        %v1975 = vsel %vm739, %v1939, -inf
        %1976 = vmax.xlane.f32.xlu0 %v1975
        %v1977 = vpop.xlane.xlu0 %1976
        %v1978 = vsel %vm739, %v1967, -inf
        %1979 = vmax.xlane.f32.xlu0 %v1978
        %v1980 = vpop.xlane.xlu0 %1979
        %v1981 = vsub.f32 %v1883, %v1971
        %v1982 = vsub.f32 %v1911, %v1974
        %v1983 = vsub.f32 %v1939, %v1977
        %v1984 = vsub.f32 %v1967, %v1980
        %v1985 = vmul.f32 %v1981, 1.442695
        %v1986 = vpow.pop %v1985
        %v1987 = vmul.f32 %v1982, 1.442695
        %v1988 = vpow.pop %v1987
        %v1989 = vmul.f32 %v1983, 1.442695
        %v1990 = vpow.pop %v1989
        %v1991 = vmul.f32 %v1984, 1.442695
        %v1992 = vpow.pop %v1991
        %v1993 = vsel %vm739, %v1986, 0.0
        %1994 = vadd.xlane.f32.xlu0 %v1993
        %v1995 = vpop.xlane.xlu0 %1994
        %v1996 = vsel %vm739, %v1988, 0.0
        %1997 = vadd.xlane.f32.xlu0 %v1996
        %v1998 = vpop.xlane.xlu0 %1997
        %v1999 = vsel %vm739, %v1990, 0.0
        %2000 = vadd.xlane.f32.xlu0 %v1999
        %v2001 = vpop.xlane.xlu0 %2000
        %v2002 = vsel %vm739, %v1992, 0.0
        %2003 = vadd.xlane.f32.xlu0 %v2002
        %v2004 = vpop.xlane.xlu0 %2003
        %2005 = vrot.lane.b32.xlu0 %v728, 104
        %v2006 = vpop.permute.xlu0 %2005
        %v2009 = vsel %vm739, %v1986, 0
        %2011 = vmatpush.msra.mxu0 0.0
        %2012 = vmatpush.msra.mxu0 0.0
        %2013 = vmatpush.msra.mxu0 0.0
        %2014 = vmatpush.msra.mxu0 0.0
        %2015 = vmatpush.msra.mxu0 0.0
        %2016 = vmatpush.msra.mxu0 0.0
        %2017 = vmatpush.msra.mxu0 0.0
        %2018 = vmatpush.msra.mxu0 0.0
        %2019 = vmatpush.msra.mxu0 0.0
        %2020 = vmatpush.msra.mxu0 0.0
        %2021 = vmatpush.msra.mxu0 0.0
        %2022 = vmatpush.msra.mxu0 0.0
        %2023 = vmatpush.msra.mxu0 0.0
        %2024 = vmatpush.msra.mxu0 0.0
        %2025 = vmatpush.msra.mxu0 0.0
        %2026 = vmatpush.msra.mxu0 %v2006
        %2027 = vmatmul.f32.gmra.mxu0 %v2009
        %v2028 = vpop.f32.mrf.mxu0
        %v2029 = vadd.f32 0.0, %v2028
        %2030 = vdwg.mxu0
        %2031 = vrot.lane.b32.xlu0 %v731, 104
        %v2032 = vpop.permute.xlu0 %2031
        %v2035 = vsel %vm739, %v1988, 0
        %2037 = vmatpush.msra.mxu0 0.0
        %2038 = vmatpush.msra.mxu0 0.0
        %2039 = vmatpush.msra.mxu0 0.0
        %2040 = vmatpush.msra.mxu0 0.0
        %2041 = vmatpush.msra.mxu0 0.0
        %2042 = vmatpush.msra.mxu0 0.0
        %2043 = vmatpush.msra.mxu0 0.0
        %2044 = vmatpush.msra.mxu0 0.0
        %2045 = vmatpush.msra.mxu0 0.0
        %2046 = vmatpush.msra.mxu0 0.0
        %2047 = vmatpush.msra.mxu0 0.0
        %2048 = vmatpush.msra.mxu0 0.0
        %2049 = vmatpush.msra.mxu0 0.0
        %2050 = vmatpush.msra.mxu0 0.0
        %2051 = vmatpush.msra.mxu0 0.0
        %2052 = vmatpush.msra.mxu0 %v2032
        %2053 = vmatmul.f32.gmra.mxu0 %v2035
        %v2054 = vpop.f32.mrf.mxu0
        %v2055 = vadd.f32 0.0, %v2054
        %2056 = vdwg.mxu0
        %2057 = vrot.lane.b32.xlu0 %v734, 104
        %v2058 = vpop.permute.xlu0 %2057
        %v2061 = vsel %vm739, %v1990, 0
        %2063 = vmatpush.msra.mxu0 0.0
        %2064 = vmatpush.msra.mxu0 0.0
        %2065 = vmatpush.msra.mxu0 0.0
        %2066 = vmatpush.msra.mxu0 0.0
        %2067 = vmatpush.msra.mxu0 0.0
        %2068 = vmatpush.msra.mxu0 0.0
        %2069 = vmatpush.msra.mxu0 0.0
        %2070 = vmatpush.msra.mxu0 0.0
        %2071 = vmatpush.msra.mxu0 0.0
        %2072 = vmatpush.msra.mxu0 0.0
        %2073 = vmatpush.msra.mxu0 0.0
        %2074 = vmatpush.msra.mxu0 0.0
        %2075 = vmatpush.msra.mxu0 0.0
        %2076 = vmatpush.msra.mxu0 0.0
        %2077 = vmatpush.msra.mxu0 0.0
        %2078 = vmatpush.msra.mxu0 %v2058
        %2079 = vmatmul.f32.gmra.mxu0 %v2061
        %v2080 = vpop.f32.mrf.mxu0
        %v2081 = vadd.f32 0.0, %v2080
        %2082 = vdwg.mxu0
        %2083 = vrot.lane.b32.xlu0 %v737, 104
        %v2084 = vpop.permute.xlu0 %2083
        %v2087 = vsel %vm739, %v1992, 0
        %2089 = vmatpush.msra.mxu0 0.0
        %2090 = vmatpush.msra.mxu0 0.0
        %2091 = vmatpush.msra.mxu0 0.0
        %2092 = vmatpush.msra.mxu0 0.0
        %2093 = vmatpush.msra.mxu0 0.0
        %2094 = vmatpush.msra.mxu0 0.0
        %2095 = vmatpush.msra.mxu0 0.0
        %2096 = vmatpush.msra.mxu0 0.0
        %2097 = vmatpush.msra.mxu0 0.0
        %2098 = vmatpush.msra.mxu0 0.0
        %2099 = vmatpush.msra.mxu0 0.0
        %2100 = vmatpush.msra.mxu0 0.0
        %2101 = vmatpush.msra.mxu0 0.0
        %2102 = vmatpush.msra.mxu0 0.0
        %2103 = vmatpush.msra.mxu0 0.0
        %2104 = vmatpush.msra.mxu0 %v2084
        %2105 = vmatmul.f32.gmra.mxu0 %v2087
        %v2106 = vpop.f32.mrf.mxu0
        %v2107 = vadd.f32 0.0, %v2106
        %2108 = vdwg.mxu0
        %v2109 = vrcp.pop %v1995
        %v2110 = vmul.f32 %v1995, %v2109
        %v2111 = vsub.f32 1.0, %v2110
        %v2112 = vmul.f32 %v2109, %v2111
        %v2113 = vadd.f32 %v2109, %v2112
        %vm2114 = vweird.f32 %v1995
        %vm2115 = vweird.f32 %v2109
        %vm2116 = vmor %vm2114, %vm2115
        %v2117 = vsel %vm2116, %v2109, %v2113
        %v2118 = vand.u32 2147483647, %v1995
        %vm2119 = vcmp.eq.f32.partialorder %v2118, 8.507059e+37
        %v2120 = vand.u32 %v1995, 2147483648
        %v2121 = vor.u32 1.1754944e-38, %v2120
        %v2122 = vsel %vm2119, %v2121, %v2117
        %v2123 = vrcp.pop %v1998
        %v2124 = vmul.f32 %v1998, %v2123
        %v2125 = vsub.f32 1.0, %v2124
        %v2126 = vmul.f32 %v2123, %v2125
        %v2127 = vadd.f32 %v2123, %v2126
        %vm2128 = vweird.f32 %v1998
        %vm2129 = vweird.f32 %v2123
        %vm2130 = vmor %vm2128, %vm2129
        %v2131 = vsel %vm2130, %v2123, %v2127
        %v2132 = vand.u32 2147483647, %v1998
        %vm2133 = vcmp.eq.f32.partialorder %v2132, 8.507059e+37
        %v2134 = vand.u32 %v1998, 2147483648
        %v2135 = vor.u32 1.1754944e-38, %v2134
        %v2136 = vsel %vm2133, %v2135, %v2131
        %v2137 = vrcp.pop %v2001
        %v2138 = vmul.f32 %v2001, %v2137
        %v2139 = vsub.f32 1.0, %v2138
        %v2140 = vmul.f32 %v2137, %v2139
        %v2141 = vadd.f32 %v2137, %v2140
        %vm2142 = vweird.f32 %v2001
        %vm2143 = vweird.f32 %v2137
        %vm2144 = vmor %vm2142, %vm2143
        %v2145 = vsel %vm2144, %v2137, %v2141
        %v2146 = vand.u32 2147483647, %v2001
        %vm2147 = vcmp.eq.f32.partialorder %v2146, 8.507059e+37
        %v2148 = vand.u32 %v2001, 2147483648
        %v2149 = vor.u32 1.1754944e-38, %v2148
        %v2150 = vsel %vm2147, %v2149, %v2145
        %v2151 = vrcp.pop %v2004
        %v2152 = vmul.f32 %v2004, %v2151
        %v2153 = vsub.f32 1.0, %v2152
        %v2154 = vmul.f32 %v2151, %v2153
        %v2155 = vadd.f32 %v2151, %v2154
        %vm2156 = vweird.f32 %v2004
        %vm2157 = vweird.f32 %v2151
        %vm2158 = vmor %vm2156, %vm2157
        %v2159 = vsel %vm2158, %v2151, %v2155
        %v2160 = vand.u32 2147483647, %v2004
        %vm2161 = vcmp.eq.f32.partialorder %v2160, 8.507059e+37
        %v2162 = vand.u32 %v2004, 2147483648
        %v2163 = vor.u32 1.1754944e-38, %v2162
        %v2164 = vsel %vm2161, %v2163, %v2159
        %v2165 = vmul.f32 %v2029, %v2122
        %v2166 = vmul.f32 %v2055, %v2136
        %v2167 = vmul.f32 %v2081, %v2150
        %v2168 = vmul.f32 %v2107, %v2164
        %v2169 = vsel %vm739, %v2165, 0.0
        %v2170 = vrot.slane %v2169, 4
        %v2171 = vadd.f32 %v2169, %v2170
        %v2172 = vrot.slane %v2171, 2
        %v2173 = vadd.f32 %v2171, %v2172
        %v2174 = vrot.slane %v2173, 1
        %v2175 = vadd.f32 %v2173, %v2174
        %v2176 = vsel %vm739, %v2166, 0.0
        %v2177 = vrot.slane %v2176, 4
        %v2178 = vadd.f32 %v2176, %v2177
        %v2179 = vrot.slane %v2178, 2
        %v2180 = vadd.f32 %v2178, %v2179
        %v2181 = vrot.slane %v2180, 1
        %v2182 = vadd.f32 %v2180, %v2181
        %v2183 = vsel %vm739, %v2167, 0.0
        %v2184 = vrot.slane %v2183, 4
        %v2185 = vadd.f32 %v2183, %v2184
        %v2186 = vrot.slane %v2185, 2
        %v2187 = vadd.f32 %v2185, %v2186
        %v2188 = vrot.slane %v2187, 1
        %v2189 = vadd.f32 %v2187, %v2188
        %v2190 = vsel %vm739, %v2168, 0.0
        %v2191 = vrot.slane %v2190, 4
        %v2192 = vadd.f32 %v2190, %v2191
        %v2193 = vrot.slane %v2192, 2
        %v2194 = vadd.f32 %v2192, %v2193
        %v2195 = vrot.slane %v2194, 1
        %v2196 = vadd.f32 %v2194, %v2195
        %v2197 = vmul.f32 %v2175, %v1066
        %v2198 = vmul.f32 %v2182, %v1066
        %v2199 = vmul.f32 %v2189, %v1066
        %v2200 = vmul.f32 %v2196, %v1066
        %v2201 = vld [vmem:[#allocation11 + $0x18] sm:$0xff]
        %v2206 = vsel %vm1425, %v2198, %v2197
        %v2207 = vsel %vm1427, %v2199, %v2206
        %v2208 = vsel %vm1429, %v2200, %v2207
        %v2209 = vsel %vm739, %v2208, 0
        %2211 = vmatpush.msra.mxu0 0.0
        %2212 = vmatpush.msra.mxu0 0.0
        %2213 = vmatpush.msra.mxu0 0.0
        %2214 = vmatpush.msra.mxu0 0.0
        %2215 = vmatpush.msra.mxu0 0.0
        %2216 = vmatpush.msra.mxu0 0.0
        %2217 = vmatpush.msra.mxu0 0.0
        %2218 = vmatpush.msra.mxu0 0.0
        %2219 = vmatpush.msra.mxu0 0.0
        %2220 = vmatpush.msra.mxu0 0.0
        %2221 = vmatpush.msra.mxu0 0.0
        %2222 = vmatpush.msra.mxu0 0.0
        %2223 = vmatpush.msra.mxu0 0.0
        %2224 = vmatpush.msra.mxu0 0.0
        %2225 = vmatpush.msra.mxu0 0.0
        %2226 = vmatpush.msra.mxu0 %v2201
        %2227 = vmatmul.f32.gmra.mxu0 %v2209
        %v2228 = vpop.f32.mrf.mxu0
        %v2229 = vadd.f32 0.0, %v2228
        %2230 = vdwg.mxu0
        %v2231 = vadd.f32 %v1856, %v2229
        %v2232 = vld [vmem:[%s10] sm:$0x1]
        %v2234 = vperm.slane %v2232, 0
        %v2236 = vadd.f32 %v2231, %v2234
        %v2237 = vld [vmem:[#allocation13] sm:$0xff]
        %v2238 = vld [vmem:[#allocation13 + $0x8] sm:$0xff]
        %v2239 = vld [vmem:[#allocation13 + $0x10] sm:$0xff]
        %v2240 = vld [vmem:[#allocation13 + $0x18] sm:$0xff]
        %v2241 = vld [vmem:[%s12] sm:$0x1]
        %v2243 = vperm.slane %v2241, 0
        %v2246 = vsel %vm574, %v2236, 0
        %2248 = vmatpush.msra.mxu0 0.0
        %2249 = vmatpush.msra.mxu0 0.0
        %2250 = vmatpush.msra.mxu0 0.0
        %2251 = vmatpush.msra.mxu0 0.0
        %2252 = vmatpush.msra.mxu0 0.0
        %2253 = vmatpush.msra.mxu0 0.0
        %2254 = vmatpush.msra.mxu0 0.0
        %2255 = vmatpush.msra.mxu0 0.0
        %2256 = vmatpush.msra.mxu0 0.0
        %2257 = vmatpush.msra.mxu0 0.0
        %2258 = vmatpush.msra.mxu0 0.0
        %2259 = vmatpush.msra.mxu0 0.0
        %2260 = vmatpush.msra.mxu0 %v2240
        %2261 = vmatpush.msra.mxu0 %v2239
        %2262 = vmatpush.msra.mxu0 %v2238
        %2263 = vmatpush.msra.mxu0 %v2237
        %2264 = vmatmul.f32.gmra.mxu0 %v2246
        %v2265 = vpop.f32.mrf.mxu0
        %v2266 = vadd.f32 %v2243, %v2265
        %2267 = vdwg.mxu0
        %v2269 = vrot.slane %v2266, 1
        %v2270 = vrot.slane %v2266, 2
        %v2271 = vrot.slane %v2266, 3
        %2275 = vst [vmem:[%s559] sm:$0x1] %v2266
        %2276 = vst [vmem:[%s559 + $0x1] sm:$0x1] %v2269
        %2277 = vst [vmem:[%s559 + $0x2] sm:$0x1] %v2270
        %2278 = vst [vmem:[%s559 + $0x3] sm:$0x1] %v2271
        %s2279 = sand.u32 %s319, 1
        %s2280 = scalar_lea.sflag [#allocation4], %s2279
        %s2281 = sand.u32 %s319, 1
        %s2282 = smul.addr %s2281, 4
        %s2283 = scalar_lea.vmem [#allocation14], %s2282
        // Predicated region
        $region101: #{tpu_custom_call.1} parent=71 // pred_check
          %p2284 = pneg %p329
        $region102: #{tpu_custom_call.1} parent=71 // pred_check_branch
          %2286 = sbr.rel (%p2284) target = $region104
        $region103: #{tpu_custom_call.1} parent=71 // pred_region
          %s2287 = smul.u32 4, %s33
          %2289 = vsyncadd %s2280, 0
          %s2290 = scalar_lea.hbm %s13, %s2287
          %s2291 = sshll.u32 %s2283, 4
          %s2292 = int_to_ptr.vmem [resolvable:$true] %s2291
          %s2293 = sshll.u32 %s2290, 4
          %s2294 = int_to_ptr.hbm [resolvable:$true] %s2293
          %2299 = dma.vmem_to_hbm [thread:$0]  %s2292, 64, %s2294, %s2280, 16, 16, 1
        $region104: #{tpu_custom_call.1} parent=71 // pred_fallthru
          _
      $region72: #{tpu_custom_call.1} parent=5 // pred_fallthru
        _
      %p2300 = scmp.le.s32.totalorder 2, %s28
      // Predicated region
      $region105: #{tpu_custom_call.1} parent=5 // pred_check
        %p2301 = pneg %p2300
      $region106: #{tpu_custom_call.1} parent=5 // pred_check_branch
        %2303 = sbr.rel (%p2301) target = $region108
      $region107: #{tpu_custom_call.1} parent=5 // pred_region
        %s2304 = ssub.s32 %s28, 2
        // Predicated region
        $region109: #{tpu_custom_call.1} parent=107 // pred_check
          %p2305 = pneg %p335
        $region110: #{tpu_custom_call.1} parent=107 // pred_check_branch
          %2307 = sbr.rel (%p2305) target = $region112
        $region111: #{tpu_custom_call.1} parent=107 // pred_region
          %s2308 = sand.u32 %s320, 1
          %s2309 = scalar_lea.sflag [#allocation4], %s2308
          %s2310 = sand.u32 %s320, 1
          %s2311 = smul.addr %s2310, 4
          %s2312 = scalar_lea.vmem [#allocation14], %s2311
          %2314 = dma.done %s2309, 64
        $region112: #{tpu_custom_call.1} parent=107 // pred_fallthru
          _
      $region108: #{tpu_custom_call.1} parent=5 // pred_fallthru
        _
    $region6: #{tpu_custom_call.1} parent=1 // loop_footer
      %s32 = sadd.s32 1, %s28
    $region7: #{tpu_custom_call.1} parent=1 // loop_footer_branch
      %27 = sbr.rel target = $region3
    $region8: #{tpu_custom_call.1} parent=1 // loop_exit
      _
    %2315 = vsyncpa [#allocation3], 1
    %s2316 = scalar_lea.sflag [#allocation3], 1
    %2317 = vsyncpa %s2316, 1
    %2318 = vsyncpa [#allocation6], 1
    %2319 = vsyncpa [#allocation9], 1
    %2320 = vsyncpa [#allocation12], 1
    %2321 = vsyncpa [#allocation4], 1
    %s2322 = scalar_lea.sflag [#allocation4], 1
    %2323 = vsyncpa %s2322, 1

</llo_original>
